<compile_context>
chip_gen: v5e
topology: v5e:2x2
jax: 0.10.0
libtpu: 0.0.40
codegen_flags: <defaults>
</compile_context>

<pallas_src>
import jax
import jax.numpy as jnp
from jax.experimental import pallas as pl
from jax.experimental.pallas import tpu as pltpu

# ----------------------------- configuration --------------------------------
IN_CHANNEL = 256        # de_config['in_channel']  (encoder output width)
NUM_CLS = 8             # de_config['num_cls']
NUM_CLS_PAD = 128       # lane-dense padded classifier output width
HID1, HID2 = 512, 256   # fixed by the nn.Sequential definition
BN_EPS = 1e-5
ENC_DIN = 15            # per-face feature: centers(3) + normals(3) + rel corners(9)
ENC_DIN_PAD = 16        # padded contraction dim for the encoder matmul
MAX_CHUNK_FACES = 4096  # VMEM-budgeted for v7x (chunk*256*4B f32 intermediate)


# ------------------------------ fused kernel ---------------------------------
def _network_kernel(x_ref, we_ref, be_ref,
                    w1_ref, b1_ref, w2_ref, b2_ref, w3_ref, b3_ref,
                    y_ref, fea_ref, acc_ref):
    # grid = (B, num_face_chunks); axis 0 "parallel", axis 1 "arbitrary" (reduction)
    i = pl.program_id(1)
    last = pl.num_programs(1) - 1

    # ---- encoder chunk: per-face linear, pooled BEFORE bias/ReLU ------------
    # x_ref: (1, CHUNK, 16) bf16 -> (CHUNK, 16); we_ref: (16, C) bf16 (resident)
    z = jnp.dot(x_ref[0], we_ref[...], preferred_element_type=jnp.float32)
    chunk_max = jnp.max(z, axis=0, keepdims=True)               # (1, C) f32

    @pl.when(i == 0)
    def _():
        # bias/ReLU hoisted past the pool -> raw matmul outputs can be negative,
        # so the running-max accumulator must start at -inf.
        acc_ref[...] = jnp.full(acc_ref.shape, -jnp.inf, acc_ref.dtype)

    acc_ref[...] = jnp.maximum(acc_ref[...], chunk_max)

    # ---- finalize: bias + ReLU on pooled feature, then classifier -----------
    @pl.when(i == last)
    def _():
        fea = jnp.maximum(acc_ref[...] + be_ref[...], 0.0)      # (1, C) f32
        fea_ref[...] = fea.reshape(fea_ref.shape)

        # classifier (BN folded into weights; Dropout = identity in eval)
        a = jnp.dot(fea.astype(jnp.bfloat16), w1_ref[...],
                    preferred_element_type=jnp.float32) + b1_ref[...]
        a = jnp.maximum(a, 0.0)                                  # Linear+BN+ReLU (512)
        a = jnp.dot(a.astype(jnp.bfloat16), w2_ref[...],
                    preferred_element_type=jnp.float32) + b2_ref[...]
        a = jnp.maximum(a, 0.0)                                  # Linear+BN+ReLU (256)
        y = jnp.dot(a.astype(jnp.bfloat16), w3_ref[...],
                    preferred_element_type=jnp.float32) + b3_ref[...]
        y_ref[...] = y.reshape(y_ref.shape)


def _pick_face_chunk(num_faces, max_chunk=MAX_CHUNK_FACES):
    """Largest multiple of 8 that divides F and fits the VMEM budget."""
    best = num_faces                    # fallback: single chunk (no tiling)
    c = 8
    while c <= min(num_faces, max_chunk):
        if num_faces % c == 0:
            best = c
        c += 8
    return best


def network_pallas(face_feats, enc_params, cls_params, *, chunk_faces=None):
    """face_feats: (B, F, ENC_DIN_PAD) f32. Returns (y (B,NUM_CLS) f32, fea (B,C) f32)."""
    B, F, _ = face_feats.shape
    chunk = chunk_faces if chunk_faces is not None else _pick_face_chunk(F)
    assert F % chunk == 0, "face chunk must divide the face count"
    num_chunks = F // chunk

    x = face_feats.astype(jnp.bfloat16)                          # (B, F, 16)
    we, be = enc_params
    w1, b1, w2, b2, w3, b3 = cls_params

    # weights/biases: full blocks, constant index maps -> resident in VMEM
    full = lambda arr: pl.BlockSpec(arr.shape,
                                    lambda b, i, _nd=arr.ndim: (0,) * _nd)

    y_pad, fea = pl.pallas_call(
        _network_kernel,
        out_shape=(jax.ShapeDtypeStruct((B, 1, NUM_CLS_PAD), jnp.float32),
                   jax.ShapeDtypeStruct((B, 1, IN_CHANNEL), jnp.float32)),
        grid_spec=pltpu.PrefetchScalarGridSpec(
            num_scalar_prefetch=0,
            grid=(B, num_chunks),
            in_specs=[pl.BlockSpec((1, chunk, ENC_DIN_PAD), lambda b, i: (b, i, 0)),
                      full(we), full(be),
                      full(w1), full(b1), full(w2), full(b2),
                      full(w3), full(b3)],
            out_specs=(pl.BlockSpec((1, 1, NUM_CLS_PAD), lambda b, i: (b, 0, 0)),
                       pl.BlockSpec((1, 1, IN_CHANNEL), lambda b, i: (b, 0, 0))),
            scratch_shapes=[pltpu.VMEM((1, IN_CHANNEL), jnp.float32)],
        ),
        compiler_params=pltpu.CompilerParams(
            dimension_semantics=("parallel", "arbitrary"),
            vmem_limit_bytes=32 * 1024 * 1024),
    )(x, we, be, w1, b1, w2, b2, w3, b3)
    return y_pad[:, 0, :NUM_CLS], fea[:, 0, :]


# ------------------------------ glue / params -------------------------------
def init_params(key):
    """Raw (PyTorch-style) parameters: Linear + BatchNorm per classifier layer."""
    ks = jax.random.split(key, 12)

    def linear(kw, kb, fan_in, fan_out):
        lim = 1.0 / jnp.sqrt(fan_in)
        w = jax.random.uniform(kw, (fan_in, fan_out), jnp.float32, -lim, lim)
        b = jax.random.uniform(kb, (1, fan_out), jnp.float32, -lim, lim)
        return w, b

    def bn(kg, kb, dim):
        gamma = 1.0 + 0.1 * jax.random.normal(kg, (1, dim), jnp.float32)
        beta = 0.1 * jax.random.normal(kb, (1, dim), jnp.float32)
        running_mean = jnp.zeros((1, dim), jnp.float32)
        running_var = jnp.ones((1, dim), jnp.float32)
        s = gamma / jnp.sqrt(running_var + BN_EPS)
        t = beta - running_mean * s
        return s, t

    w_enc, b_enc = linear(ks[0], ks[1], ENC_DIN, IN_CHANNEL)
    w1, b1 = linear(ks[2], ks[3], IN_CHANNEL, HID1)
    s1, t1 = bn(ks[4], ks[5], HID1)
    w2, b2 = linear(ks[6], ks[7], HID1, HID2)
    s2, t2 = bn(ks[8], ks[9], HID2)
    w3, b3 = linear(ks[10], ks[11], HID2, NUM_CLS)
    return (w_enc, b_enc), (w1, b1, s1, t1, w2, b2, s2, t2, w3, b3)


def prep_params(raw_enc, raw_cls):
    """Fold BN into Linear, pad to lane-friendly shapes, cast weights to bf16."""
    w_enc, b_enc = raw_enc
    w1, b1, s1, t1, w2, b2, s2, t2, w3, b3 = raw_cls
    # pad encoder contraction dim 15 -> 16 (matches zero-padded feature column)
    w_enc_p = jnp.pad(w_enc, ((0, ENC_DIN_PAD - ENC_DIN), (0, 0)))
    # fold eval-mode BatchNorm: y = (xW + b) * s + t  ==  x(W*s) + (b*s + t)
    w1f, b1f = w1 * s1, b1 * s1 + t1
    w2f, b2f = w2 * s2, b2 * s2 + t2
    # pad classifier output width 8 -> 128 for lane-dense (unmasked) stores
    w3p = jnp.pad(w3, ((0, 0), (0, NUM_CLS_PAD - NUM_CLS)))
    b3p = jnp.pad(b3, ((0, 0), (0, NUM_CLS_PAD - NUM_CLS)))
    bf = lambda w: w.astype(jnp.bfloat16)
    enc_params = (bf(w_enc_p), b_enc)                       # biases stay f32
    cls_params = (bf(w1f), b1f, bf(w2f), b2f, bf(w3p), b3p)
    return enc_params, cls_params


def build_face_features(verts, faces, centers, normals):
    # glue: gather corner vertices and build per-face descriptor (channels-last)
    corners = jax.vmap(lambda v, f: v[f])(verts, faces)          # (B, F, 3, 3)
    rel = corners - centers[:, :, None, :]                       # corner vectors
    rel = rel.reshape(corners.shape[0], corners.shape[1], 9)     # (B, F, 9)
    feat = jnp.concatenate([centers, normals, rel], axis=-1)     # (B, F, 15)
    pad = jnp.zeros(feat.shape[:-1] + (ENC_DIN_PAD - ENC_DIN,), feat.dtype)
    return jnp.concatenate([feat, pad], axis=-1)                 # (B, F, 16)


def network_forward(verts, faces, centers, normals, ring_1, ring_2, ring_3,
                    enc_params, cls_params, *, chunk_faces=None):
    del ring_1, ring_2, ring_3  # TODO(synk): rings belong to the unprovided encoder
    x = build_face_features(verts, faces, centers, normals)
    y, fea = network_pallas(x, enc_params, cls_params, chunk_faces=chunk_faces)
    return y, fea


def reference_forward(x_pad, enc_params, cls_params):
    """Pure-jnp reference with identical bf16/f32 numerics (correctness check).

    Applies bias+ReLU *before* the pool (as the original module would), which
    also cross-validates the hoisted-past-the-pool formulation in the kernel.
    """
    we, be = enc_params
    w1, b1, w2, b2, w3, b3 = cls_params
    B, F, _ = x_pad.shape
    xb = x_pad.astype(jnp.bfloat16).reshape(B * F, -1)
    h = jnp.maximum(jnp.dot(xb, we, preferred_element_type=jnp.float32) + be, 0.0)
    fea = jnp.max(h.reshape(B, F, -1), axis=1)
    a = jnp.maximum(jnp.dot(fea.astype(jnp.bfloat16), w1,
                            preferred_element_type=jnp.float32) + b1, 0.0)
    a = jnp.maximum(jnp.dot(a.astype(jnp.bfloat16), w2,
                            preferred_element_type=jnp.float32) + b2, 0.0)
    y = jnp.dot(a.astype(jnp.bfloat16), w3,
                preferred_element_type=jnp.float32) + b3
    return y[:, :NUM_CLS], fea


# ----------------------------------- main ------------------------------------
if __name__ == "__main__":
    key = jax.random.PRNGKey(0)
    k_param, k_v, k_f, k_n, k_r1, k_r2, k_r3 = jax.random.split(key, 7)

    B, V, F = 2, 64, 256
    CHUNK = 64                                        # 4 face chunks per mesh
    verts = jax.random.normal(k_v, (B, V, 3), jnp.float32)
    faces = jax.random.randint(k_f, (B, F, 3), 0, V, jnp.int32)
    corners = jax.vmap(lambda v, f: v[f])(verts, faces)
    centers = corners.mean(axis=2)                                # (B, F, 3)
    normals_raw = jax.random.normal(k_n, (B, F, 3), jnp.float32)
    normals = normals_raw / jnp.linalg.norm(normals_raw, axis=-1, keepdims=True)
    ring_1 = jax.random.randint(k_r1, (B, F, 3), 0, F, jnp.int32)
    ring_2 = jax.random.randint(k_r2, (B, F, 6), 0, F, jnp.int32)
    ring_3 = jax.random.randint(k_r3, (B, F, 12), 0, F, jnp.int32)

    raw_enc, raw_cls = init_params(k_param)
    enc_params, cls_params = prep_params(raw_enc, raw_cls)

    fwd = jax.jit(lambda *a: network_forward(*a, chunk_faces=CHUNK))
    y, fea = fwd(verts, faces, centers, normals,
                 ring_1, ring_2, ring_3, enc_params, cls_params)
    jax.block_until_ready((y, fea))

    # correctness check vs a pure-jnp reference using identical numerics
    x_pad = build_face_features(verts, faces, centers, normals)
    y_exp, fea_exp = reference_forward(x_pad, enc_params, cls_params)

    assert y.shape == (B, NUM_CLS) and fea.shape == (B, IN_CHANNEL)
    assert jnp.all(jnp.isfinite(y)) and jnp.all(jnp.isfinite(fea))
    assert jnp.allclose(fea, fea_exp, rtol=1e-2, atol=1e-2)
    assert jnp.allclose(y, y_exp, rtol=1e-2, atol=1e-2)
    print("KERNEL_OK")
</pallas_src>

<mosaic_0001>
module attributes {stable_mosaic.version = 11 : i64} {
  func.func @_network_kernel(%arg0: i32, %arg1: i32, %arg2: memref<1x64x16xbf16, #tpu.memory_space<vmem>>, %arg3: memref<16x256xbf16, #tpu.memory_space<vmem>>, %arg4: memref<1x256xf32, #tpu.memory_space<vmem>>, %arg5: memref<256x512xbf16, #tpu.memory_space<vmem>>, %arg6: memref<1x512xf32, #tpu.memory_space<vmem>>, %arg7: memref<512x256xbf16, #tpu.memory_space<vmem>>, %arg8: memref<1x256xf32, #tpu.memory_space<vmem>>, %arg9: memref<256x128xbf16, #tpu.memory_space<vmem>>, %arg10: memref<1x128xf32, #tpu.memory_space<vmem>>, %arg11: memref<1x1x128xf32, #tpu.memory_space<vmem>>, %arg12: memref<1x1x256xf32, #tpu.memory_space<vmem>>, %arg13: memref<1x256xf32, #tpu.memory_space<vmem>>) attributes {dimension_semantics = [#tpu.dimension_semantics<parallel>, #tpu.dimension_semantics<arbitrary>], iteration_bounds = array<i64: 2, 4>, scalar_prefetch = 0 : i64, scratch_operands = 1 : i64, tpu.core_type = #tpu.core_type<tc>, window_params = [{transform_indices = @transform_0, window_bounds = array<i64: 1, 64, 16>}, {pipeline_mode = #tpu.pipeline_mode<synchronous>, transform_indices = @transform_1, window_bounds = array<i64: 16, 256>}, {pipeline_mode = #tpu.pipeline_mode<synchronous>, transform_indices = @transform_2, window_bounds = array<i64: 1, 256>}, {pipeline_mode = #tpu.pipeline_mode<synchronous>, transform_indices = @transform_3, window_bounds = array<i64: 256, 512>}, {pipeline_mode = #tpu.pipeline_mode<synchronous>, transform_indices = @transform_4, window_bounds = array<i64: 1, 512>}, {pipeline_mode = #tpu.pipeline_mode<synchronous>, transform_indices = @transform_5, window_bounds = array<i64: 512, 256>}, {pipeline_mode = #tpu.pipeline_mode<synchronous>, transform_indices = @transform_6, window_bounds = array<i64: 1, 256>}, {pipeline_mode = #tpu.pipeline_mode<synchronous>, transform_indices = @transform_7, window_bounds = array<i64: 256, 128>}, {pipeline_mode = #tpu.pipeline_mode<synchronous>, transform_indices = @transform_8, window_bounds = array<i64: 1, 128>}, {transform_indices = @transform_9, window_bounds = array<i64: 1, 1, 128>}, {transform_indices = @transform_10, window_bounds = array<i64: 1, 1, 256>}]} {
    %c0 = arith.constant 0 : index
    %c0_0 = arith.constant 0 : index
    %c0_1 = arith.constant 0 : index
    %0 = vector.load %arg2[%c0, %c0_0, %c0_1] : memref<1x64x16xbf16, #tpu.memory_space<vmem>>, vector<1x64x16xbf16>
    %1 = vector.shape_cast %0 : vector<1x64x16xbf16> to vector<64x16xbf16>
    %c0_2 = arith.constant 0 : index
    %c0_3 = arith.constant 0 : index
    %2 = vector.load %arg3[%c0_2, %c0_3] : memref<16x256xbf16, #tpu.memory_space<vmem>>, vector<16x256xbf16>
    %cst = arith.constant dense<0.000000e+00> : vector<64x256xf32>
    %3 = tpu.matmul %1, %2, %cst {dimension_numbers = #tpu.dot_dimension_numbers<[1], [0], [0], [1], [0, 0, 1, 1], [], []>} : vector<64x16xbf16>, vector<16x256xbf16>, vector<64x256xf32> -> vector<64x256xf32>
    %cst_4 = arith.constant dense<0xFF800000> : vector<256xf32>
    %4 = vector.multi_reduction <maximumf>, %3, %cst_4 [0] : vector<64x256xf32> to vector<256xf32>
    %5 = vector.shape_cast %4 : vector<256xf32> to vector<1x256xf32>
    %c0_i32 = arith.constant 0 : i32
    %6 = arith.cmpi eq, %arg1, %c0_i32 : i32
    %7 = arith.extui %6 : i1 to i32
    %c0_i32_5 = arith.constant 0 : i32
    %8 = arith.cmpi ne, %7, %c0_i32_5 : i32
    scf.if %8 {
      %cst_11 = arith.constant 0xFF800000 : f32
      %15 = vector.broadcast %cst_11 : f32 to vector<1x256xf32>
      %c0_12 = arith.constant 0 : index
      %c0_13 = arith.constant 0 : index
      %16 = vector.load %arg13[%c0_12, %c0_13] : memref<1x256xf32, #tpu.memory_space<vmem>>, vector<1x256xf32>
      tpu.vector_store %arg13[%c0_12, %c0_13], %15 {strides = array<i32>} : memref<1x256xf32, #tpu.memory_space<vmem>>, vector<1x256xf32>,
    } else {
    }
    %c0_6 = arith.constant 0 : index
    %c0_7 = arith.constant 0 : index
    %9 = vector.load %arg13[%c0_6, %c0_7] : memref<1x256xf32, #tpu.memory_space<vmem>>, vector<1x256xf32>
    %10 = arith.maximumf %9, %5 : vector<1x256xf32>
    %c0_8 = arith.constant 0 : index
    %c0_9 = arith.constant 0 : index
    %11 = vector.load %arg13[%c0_8, %c0_9] : memref<1x256xf32, #tpu.memory_space<vmem>>, vector<1x256xf32>
    tpu.vector_store %arg13[%c0_8, %c0_9], %10 {strides = array<i32>} : memref<1x256xf32, #tpu.memory_space<vmem>>, vector<1x256xf32>,
    %c3_i32 = arith.constant 3 : i32
    %12 = arith.cmpi eq, %arg1, %c3_i32 : i32
    %13 = arith.extui %12 : i1 to i32
    %c0_i32_10 = arith.constant 0 : i32
    %14 = arith.cmpi ne, %13, %c0_i32_10 : i32
    scf.if %14 {
      %c0_11 = arith.constant 0 : index
      %c0_12 = arith.constant 0 : index
      %15 = vector.load %arg13[%c0_11, %c0_12] : memref<1x256xf32, #tpu.memory_space<vmem>>, vector<1x256xf32>
      %c0_13 = arith.constant 0 : index
      %c0_14 = arith.constant 0 : index
      %16 = vector.load %arg4[%c0_13, %c0_14] : memref<1x256xf32, #tpu.memory_space<vmem>>, vector<1x256xf32>
      %17 = arith.addf %15, %16 : vector<1x256xf32>
      %cst_15 = arith.constant 0.000000e+00 : f32
      %18 = vector.broadcast %cst_15 : f32 to vector<1x256xf32>
      %19 = arith.maximumf %17, %18 : vector<1x256xf32>
      %20 = vector.shape_cast %19 : vector<1x256xf32> to vector<1x1x256xf32>
      %c0_16 = arith.constant 0 : index
      %c0_17 = arith.constant 0 : index
      %c0_18 = arith.constant 0 : index
      %21 = vector.load %arg12[%c0_16, %c0_17, %c0_18] : memref<1x1x256xf32, #tpu.memory_space<vmem>>, vector<1x1x256xf32>
      tpu.vector_store %arg12[%c0_16, %c0_17, %c0_18], %20 {strides = array<i32>} : memref<1x1x256xf32, #tpu.memory_space<vmem>>, vector<1x1x256xf32>,
      %22 = arith.truncf %19 : vector<1x256xf32> to vector<1x256xbf16>
      %c0_19 = arith.constant 0 : index
      %c0_20 = arith.constant 0 : index
      %23 = vector.load %arg5[%c0_19, %c0_20] : memref<256x512xbf16, #tpu.memory_space<vmem>>, vector<256x512xbf16>
      %cst_21 = arith.constant dense<0.000000e+00> : vector<1x512xf32>
      %24 = tpu.matmul %22, %23, %cst_21 {dimension_numbers = #tpu.dot_dimension_numbers<[1], [0], [0], [1], [0, 0, 1, 1], [], []>} : vector<1x256xbf16>, vector<256x512xbf16>, vector<1x512xf32> -> vector<1x512xf32>
      %c0_22 = arith.constant 0 : index
      %c0_23 = arith.constant 0 : index
      %25 = vector.load %arg6[%c0_22, %c0_23] : memref<1x512xf32, #tpu.memory_space<vmem>>, vector<1x512xf32>
      %26 = arith.addf %24, %25 : vector<1x512xf32>
      %cst_24 = arith.constant 0.000000e+00 : f32
      %27 = vector.broadcast %cst_24 : f32 to vector<1x512xf32>
      %28 = arith.maximumf %26, %27 : vector<1x512xf32>
      %29 = arith.truncf %28 : vector<1x512xf32> to vector<1x512xbf16>
      %c0_25 = arith.constant 0 : index
      %c0_26 = arith.constant 0 : index
      %30 = vector.load %arg7[%c0_25, %c0_26] : memref<512x256xbf16, #tpu.memory_space<vmem>>, vector<512x256xbf16>
      %cst_27 = arith.constant dense<0.000000e+00> : vector<1x256xf32>
      %31 = tpu.matmul %29, %30, %cst_27 {dimension_numbers = #tpu.dot_dimension_numbers<[1], [0], [0], [1], [0, 0, 1, 1], [], []>} : vector<1x512xbf16>, vector<512x256xbf16>, vector<1x256xf32> -> vector<1x256xf32>
      %c0_28 = arith.constant 0 : index
      %c0_29 = arith.constant 0 : index
      %32 = vector.load %arg8[%c0_28, %c0_29] : memref<1x256xf32, #tpu.memory_space<vmem>>, vector<1x256xf32>
      %33 = arith.addf %31, %32 : vector<1x256xf32>
      %cst_30 = arith.constant 0.000000e+00 : f32
      %34 = vector.broadcast %cst_30 : f32 to vector<1x256xf32>
      %35 = arith.maximumf %33, %34 : vector<1x256xf32>
      %36 = arith.truncf %35 : vector<1x256xf32> to vector<1x256xbf16>
      %c0_31 = arith.constant 0 : index
      %c0_32 = arith.constant 0 : index
      %37 = vector.load %arg9[%c0_31, %c0_32] : memref<256x128xbf16, #tpu.memory_space<vmem>>, vector<256x128xbf16>
      %cst_33 = arith.constant dense<0.000000e+00> : vector<1x128xf32>
      %38 = tpu.matmul %36, %37, %cst_33 {dimension_numbers = #tpu.dot_dimension_numbers<[1], [0], [0], [1], [0, 0, 1, 1], [], []>} : vector<1x256xbf16>, vector<256x128xbf16>, vector<1x128xf32> -> vector<1x128xf32>
      %c0_34 = arith.constant 0 : index
      %c0_35 = arith.constant 0 : index
      %39 = vector.load %arg10[%c0_34, %c0_35] : memref<1x128xf32, #tpu.memory_space<vmem>>, vector<1x128xf32>
      %40 = arith.addf %38, %39 : vector<1x128xf32>
      %41 = vector.shape_cast %40 : vector<1x128xf32> to vector<1x1x128xf32>
      %c0_36 = arith.constant 0 : index
      %c0_37 = arith.constant 0 : index
      %c0_38 = arith.constant 0 : index
      %42 = vector.load %arg11[%c0_36, %c0_37, %c0_38] : memref<1x1x128xf32, #tpu.memory_space<vmem>>, vector<1x1x128xf32>
      tpu.vector_store %arg11[%c0_36, %c0_37, %c0_38], %41 {strides = array<i32>} : memref<1x1x128xf32, #tpu.memory_space<vmem>>, vector<1x1x128xf32>,
    } else {
    }
    return
  }
  func.func @transform_0(%arg0: i32, %arg1: i32) -> (i32, i32, i32) {
    %c0_i32 = arith.constant 0 : i32
    %c0_i32_0 = arith.constant 0 : i32
    return %arg0, %arg1, %c0_i32 : i32, i32, i32
  }
  func.func @transform_1(%arg0: i32, %arg1: i32) -> (i32, i32) {
    %c0_i32 = arith.constant 0 : i32
    %c0_i32_0 = arith.constant 0 : i32
    %c0_i32_1 = arith.constant 0 : i32
    return %c0_i32, %c0_i32_0 : i32, i32
  }
  func.func @transform_2(%arg0: i32, %arg1: i32) -> (i32, i32) {
    %c0_i32 = arith.constant 0 : i32
    %c0_i32_0 = arith.constant 0 : i32
    %c0_i32_1 = arith.constant 0 : i32
    return %c0_i32, %c0_i32_0 : i32, i32
  }
  func.func @transform_3(%arg0: i32, %arg1: i32) -> (i32, i32) {
    %c0_i32 = arith.constant 0 : i32
    %c0_i32_0 = arith.constant 0 : i32
    %c0_i32_1 = arith.constant 0 : i32
    return %c0_i32, %c0_i32_0 : i32, i32
  }
  func.func @transform_4(%arg0: i32, %arg1: i32) -> (i32, i32) {
    %c0_i32 = arith.constant 0 : i32
    %c0_i32_0 = arith.constant 0 : i32
    %c0_i32_1 = arith.constant 0 : i32
    return %c0_i32, %c0_i32_0 : i32, i32
  }
  func.func @transform_5(%arg0: i32, %arg1: i32) -> (i32, i32) {
    %c0_i32 = arith.constant 0 : i32
    %c0_i32_0 = arith.constant 0 : i32
    %c0_i32_1 = arith.constant 0 : i32
    return %c0_i32, %c0_i32_0 : i32, i32
  }
  func.func @transform_6(%arg0: i32, %arg1: i32) -> (i32, i32) {
    %c0_i32 = arith.constant 0 : i32
    %c0_i32_0 = arith.constant 0 : i32
    %c0_i32_1 = arith.constant 0 : i32
    return %c0_i32, %c0_i32_0 : i32, i32
  }
  func.func @transform_7(%arg0: i32, %arg1: i32) -> (i32, i32) {
    %c0_i32 = arith.constant 0 : i32
    %c0_i32_0 = arith.constant 0 : i32
    %c0_i32_1 = arith.constant 0 : i32
    return %c0_i32, %c0_i32_0 : i32, i32
  }
  func.func @transform_8(%arg0: i32, %arg1: i32) -> (i32, i32) {
    %c0_i32 = arith.constant 0 : i32
    %c0_i32_0 = arith.constant 0 : i32
    %c0_i32_1 = arith.constant 0 : i32
    return %c0_i32, %c0_i32_0 : i32, i32
  }
  func.func @transform_9(%arg0: i32, %arg1: i32) -> (i32, i32, i32) {
    %c0_i32 = arith.constant 0 : i32
    %c0_i32_0 = arith.constant 0 : i32
    %c0_i32_1 = arith.constant 0 : i32
    return %arg0, %c0_i32, %c0_i32_0 : i32, i32, i32
  }
  func.func @transform_10(%arg0: i32, %arg1: i32) -> (i32, i32, i32) {
    %c0_i32 = arith.constant 0 : i32
    %c0_i32_0 = arith.constant 0 : i32
    %c0_i32_1 = arith.constant 0 : i32
    return %arg0, %c0_i32, %c0_i32_0 : i32, i32, i32
  }
}

</mosaic_0001>

<llo_original>
// kernel: _lambda_.1
$region0: #{_lambda_.1}
  #allocation0 [shape = 'u32[]', space=smem, size = 0x4, offset = 0x4, fixed_abs, tag = 'smem constant byte address 0x4 - core index']
  #allocation1 [shape = 'u32[72,128]{1,0:T(1,128)}', space=vmem, size = 0x9000, scoped, tag = 'internal scratch']
  #allocation2 [shape = 'f32[1,256]{1,0:T(1,128)}', space=vmem, size = 0x400, scoped, tag = 'scratch operand']
  %s0 = inlined_call_operand.vmem [shape: bf16[2,256,16], index: 0, kind: input, shape index: {}]
  %s1 = inlined_call_operand.vmem [shape: bf16[16,256], index: 1, kind: input, shape index: {}]
  %s2 = inlined_call_operand.vmem [shape: f32[1,256], index: 2, kind: input, shape index: {}]
  %s3 = inlined_call_operand.vmem [shape: bf16[256,512], index: 3, kind: input, shape index: {}]
  %s4 = inlined_call_operand.vmem [shape: f32[1,512], index: 4, kind: input, shape index: {}]
  %s5 = inlined_call_operand.vmem [shape: bf16[512,256], index: 5, kind: input, shape index: {}]
  %s6 = inlined_call_operand.vmem [shape: f32[1,256], index: 6, kind: input, shape index: {}]
  %s7 = inlined_call_operand.vmem [shape: bf16[256,128], index: 7, kind: input, shape index: {}]
  %s8 = inlined_call_operand.vmem [shape: f32[1,128], index: 8, kind: input, shape index: {}]
  %s9 = inlined_call_operand.hbm [shape: f32[2,1,128], index: 9, kind: output, shape index: {0}]
  %s10 = inlined_call_operand.vmem [shape: f32[2,1,256], index: 10, kind: output, shape index: {1}]
  %11 = xla_tuple %s9, %s10
  %s12 = sld [smem:[#allocation0]]
  $region85: #{_lambda_.1} parent=0
    _
  %s14 = ssub.s32 1, %s12
  %s15 = scalar_select 0, %s14, %s12
  $region1: #{_lambda_.1} parent=0
    #allocation3 [shape = 'u8[1024]{0}', space=vmem, size = 0x400, scoped, tag = 'output window, operand 0']
    #allocation4 [shape = 's32[2]{0}', space=sflag, size = 0x8, scoped, tag = 'scoped memory for _lambda_.1']
    %16 = vsyncpa [#allocation4], 0
    %s17 = scalar_lea.sflag [#allocation4], 1
    %18 = vsyncpa %s17, 0
    loop: start=0, step=1, limit=10
    $region2: #{_lambda_.1} parent=1 // loop_pre_header
      _
    $region3: #{_lambda_.1} parent=1 // loop_header
      %s20 = sphi 0, %s24
      %p21 = scmp.ge.s32.totalorder %s20, 10
      %s27 = sphi 0, %s39
      %s28 = sphi 0, %s35
      %s29 = sphi 0, %s27
      %s30 = sphi 0, %s28
      %s31 = sphi 0, %s29
      %s32 = sphi 0, %s30
      %s44 = sphi 0, %s46
      %s47 = sphi 0, %s44
      %s48 = sphi 0, %s47
      %s64 = sphi 0, %s48
      %s68 = sphi 0, %s68
      %s70 = sphi 0, %s68
      %s71 = sphi 0, %s70
      %s85 = sphi 0, %s71
      %s89 = sphi 0, %s89
      %s91 = sphi 0, %s89
      %s92 = sphi 0, %s91
      %s106 = sphi 0, %s92
      %s110 = sphi 0, %s110
      %s112 = sphi 0, %s110
      %s113 = sphi 0, %s112
      %s127 = sphi 0, %s113
      %s131 = sphi 0, %s131
      %s133 = sphi 0, %s131
      %s134 = sphi 0, %s133
      %s148 = sphi 0, %s134
      %s152 = sphi 0, %s152
      %s154 = sphi 0, %s152
      %s155 = sphi 0, %s154
      %s169 = sphi 0, %s155
      %s173 = sphi 0, %s173
      %s175 = sphi 0, %s173
      %s176 = sphi 0, %s175
      %s190 = sphi 0, %s176
      %s194 = sphi 0, %s194
      %s196 = sphi 0, %s194
      %s197 = sphi 0, %s196
      %s211 = sphi 0, %s197
      %s215 = sphi 0, %s215
      %s217 = sphi 0, %s215
      %s218 = sphi 0, %s217
      %s232 = sphi 0, %s218
      %s238 = sphi 0, %s240
      %s241 = sphi 0, %s238
      %s242 = sphi 0, %s241
      %s258 = sphi 0, %s242
      %s264 = sphi 0, %s266
      %s267 = sphi 0, %s264
      %s268 = sphi 0, %s267
      %s284 = sphi 0, %s268
    $region4: #{_lambda_.1} parent=1 // loop_header_branch
      %23 = sbr.rel (%p21) target = $region8
    $region5: #{_lambda_.1} parent=1 // loop_body
      %s25 = ssub.s32 %s20, 1
      %s26 = ssub.s32 %s20, 2
      %s33 = sadd.s32 1, %s28
      %p34 = scmp.ge.s32.totalorder %s33, 4
      %s35 = scalar_select %p34, 0, %s33
      %s36 = sadd.s32 1, %s27
      %s37 = scalar_select %p34, %s36, %s27
      %p38 = scmp.ge.s32.totalorder %s37, 2
      %s39 = scalar_select %p38, 0, %s37
      %s40 = ssub.s32 %s27, %s39
      %s41 = ssub.s32 %s28, %s35
      %s42 = sor.u32 %s40, %s41
      %p43 = scmp.eq.s32.totalorder %s42, 0
      %s45 = sadd.s32 %s44, 1
      %s46 = scalar_select %p43, %s44, %s45
      %p49 = pneg %p43
      %p50 = scmp.eq.s32.totalorder %s20, 7
      %p51 = por %p49, %p50
      %p52 = scmp.ne.s32.totalorder %s44, %s47
      %p53 = scmp.eq.s32.totalorder %s20, 0
      %p54 = por %p52, %p53
      %p55 = scmp.ne.s32.totalorder %s44, %s47
      %p56 = scmp.eq.s32.totalorder %s25, 7
      %p57 = por %p55, %p56
      %p58 = scmp.ne.s32.totalorder %s47, %s48
      %p59 = scmp.eq.s32.totalorder %s25, 0
      %p60 = por %p58, %p59
      %p61 = scmp.ne.s32.totalorder %s47, %s48
      %p62 = scmp.eq.s32.totalorder %s26, 7
      %p63 = por %p61, %p62
      %p65 = scmp.ne.s32.totalorder %s48, %s64
      %p66 = scmp.eq.s32.totalorder %s26, 0
      %p67 = por %p65, %p66
      %s69 = sadd.s32 %s68, 1
      %p72 = scmp.eq.s32.totalorder %s20, 7
      %p73 = scmp.ne.s32.totalorder %s68, %s70
      %p74 = scmp.eq.s32.totalorder %s20, 0
      %p75 = por %p73, %p74
      %p76 = scmp.ne.s32.totalorder %s68, %s70
      %p77 = scmp.eq.s32.totalorder %s25, 7
      %p78 = por %p76, %p77
      %p79 = scmp.ne.s32.totalorder %s70, %s71
      %p80 = scmp.eq.s32.totalorder %s25, 0
      %p81 = por %p79, %p80
      %p82 = scmp.ne.s32.totalorder %s70, %s71
      %p83 = scmp.eq.s32.totalorder %s26, 7
      %p84 = por %p82, %p83
      %p86 = scmp.ne.s32.totalorder %s71, %s85
      %p87 = scmp.eq.s32.totalorder %s26, 0
      %p88 = por %p86, %p87
      %s90 = sadd.s32 %s89, 1
      %p93 = scmp.eq.s32.totalorder %s20, 7
      %p94 = scmp.ne.s32.totalorder %s89, %s91
      %p95 = scmp.eq.s32.totalorder %s20, 0
      %p96 = por %p94, %p95
      %p97 = scmp.ne.s32.totalorder %s89, %s91
      %p98 = scmp.eq.s32.totalorder %s25, 7
      %p99 = por %p97, %p98
      %p100 = scmp.ne.s32.totalorder %s91, %s92
      %p101 = scmp.eq.s32.totalorder %s25, 0
      %p102 = por %p100, %p101
      %p103 = scmp.ne.s32.totalorder %s91, %s92
      %p104 = scmp.eq.s32.totalorder %s26, 7
      %p105 = por %p103, %p104
      %p107 = scmp.ne.s32.totalorder %s92, %s106
      %p108 = scmp.eq.s32.totalorder %s26, 0
      %p109 = por %p107, %p108
      %s111 = sadd.s32 %s110, 1
      %p114 = scmp.eq.s32.totalorder %s20, 7
      %p115 = scmp.ne.s32.totalorder %s110, %s112
      %p116 = scmp.eq.s32.totalorder %s20, 0
      %p117 = por %p115, %p116
      %p118 = scmp.ne.s32.totalorder %s110, %s112
      %p119 = scmp.eq.s32.totalorder %s25, 7
      %p120 = por %p118, %p119
      %p121 = scmp.ne.s32.totalorder %s112, %s113
      %p122 = scmp.eq.s32.totalorder %s25, 0
      %p123 = por %p121, %p122
      %p124 = scmp.ne.s32.totalorder %s112, %s113
      %p125 = scmp.eq.s32.totalorder %s26, 7
      %p126 = por %p124, %p125
      %p128 = scmp.ne.s32.totalorder %s113, %s127
      %p129 = scmp.eq.s32.totalorder %s26, 0
      %p130 = por %p128, %p129
      %s132 = sadd.s32 %s131, 1
      %p135 = scmp.eq.s32.totalorder %s20, 7
      %p136 = scmp.ne.s32.totalorder %s131, %s133
      %p137 = scmp.eq.s32.totalorder %s20, 0
      %p138 = por %p136, %p137
      %p139 = scmp.ne.s32.totalorder %s131, %s133
      %p140 = scmp.eq.s32.totalorder %s25, 7
      %p141 = por %p139, %p140
      %p142 = scmp.ne.s32.totalorder %s133, %s134
      %p143 = scmp.eq.s32.totalorder %s25, 0
      %p144 = por %p142, %p143
      %p145 = scmp.ne.s32.totalorder %s133, %s134
      %p146 = scmp.eq.s32.totalorder %s26, 7
      %p147 = por %p145, %p146
      %p149 = scmp.ne.s32.totalorder %s134, %s148
      %p150 = scmp.eq.s32.totalorder %s26, 0
      %p151 = por %p149, %p150
      %s153 = sadd.s32 %s152, 1
      %p156 = scmp.eq.s32.totalorder %s20, 7
      %p157 = scmp.ne.s32.totalorder %s152, %s154
      %p158 = scmp.eq.s32.totalorder %s20, 0
      %p159 = por %p157, %p158
      %p160 = scmp.ne.s32.totalorder %s152, %s154
      %p161 = scmp.eq.s32.totalorder %s25, 7
      %p162 = por %p160, %p161
      %p163 = scmp.ne.s32.totalorder %s154, %s155
      %p164 = scmp.eq.s32.totalorder %s25, 0
      %p165 = por %p163, %p164
      %p166 = scmp.ne.s32.totalorder %s154, %s155
      %p167 = scmp.eq.s32.totalorder %s26, 7
      %p168 = por %p166, %p167
      %p170 = scmp.ne.s32.totalorder %s155, %s169
      %p171 = scmp.eq.s32.totalorder %s26, 0
      %p172 = por %p170, %p171
      %s174 = sadd.s32 %s173, 1
      %p177 = scmp.eq.s32.totalorder %s20, 7
      %p178 = scmp.ne.s32.totalorder %s173, %s175
      %p179 = scmp.eq.s32.totalorder %s20, 0
      %p180 = por %p178, %p179
      %p181 = scmp.ne.s32.totalorder %s173, %s175
      %p182 = scmp.eq.s32.totalorder %s25, 7
      %p183 = por %p181, %p182
      %p184 = scmp.ne.s32.totalorder %s175, %s176
      %p185 = scmp.eq.s32.totalorder %s25, 0
      %p186 = por %p184, %p185
      %p187 = scmp.ne.s32.totalorder %s175, %s176
      %p188 = scmp.eq.s32.totalorder %s26, 7
      %p189 = por %p187, %p188
      %p191 = scmp.ne.s32.totalorder %s176, %s190
      %p192 = scmp.eq.s32.totalorder %s26, 0
      %p193 = por %p191, %p192
      %s195 = sadd.s32 %s194, 1
      %p198 = scmp.eq.s32.totalorder %s20, 7
      %p199 = scmp.ne.s32.totalorder %s194, %s196
      %p200 = scmp.eq.s32.totalorder %s20, 0
      %p201 = por %p199, %p200
      %p202 = scmp.ne.s32.totalorder %s194, %s196
      %p203 = scmp.eq.s32.totalorder %s25, 7
      %p204 = por %p202, %p203
      %p205 = scmp.ne.s32.totalorder %s196, %s197
      %p206 = scmp.eq.s32.totalorder %s25, 0
      %p207 = por %p205, %p206
      %p208 = scmp.ne.s32.totalorder %s196, %s197
      %p209 = scmp.eq.s32.totalorder %s26, 7
      %p210 = por %p208, %p209
      %p212 = scmp.ne.s32.totalorder %s197, %s211
      %p213 = scmp.eq.s32.totalorder %s26, 0
      %p214 = por %p212, %p213
      %s216 = sadd.s32 %s215, 1
      %p219 = scmp.eq.s32.totalorder %s20, 7
      %p220 = scmp.ne.s32.totalorder %s215, %s217
      %p221 = scmp.eq.s32.totalorder %s20, 0
      %p222 = por %p220, %p221
      %p223 = scmp.ne.s32.totalorder %s215, %s217
      %p224 = scmp.eq.s32.totalorder %s25, 7
      %p225 = por %p223, %p224
      %p226 = scmp.ne.s32.totalorder %s217, %s218
      %p227 = scmp.eq.s32.totalorder %s25, 0
      %p228 = por %p226, %p227
      %p229 = scmp.ne.s32.totalorder %s217, %s218
      %p230 = scmp.eq.s32.totalorder %s26, 7
      %p231 = por %p229, %p230
      %p233 = scmp.ne.s32.totalorder %s218, %s232
      %p234 = scmp.eq.s32.totalorder %s26, 0
      %p235 = por %p233, %p234
      %s236 = ssub.s32 %s27, %s39
      %p237 = scmp.eq.s32.totalorder %s236, 0
      %s239 = sadd.s32 %s238, 1
      %s240 = scalar_select %p237, %s238, %s239
      %p243 = pneg %p237
      %p244 = scmp.eq.s32.totalorder %s20, 7
      %p245 = por %p243, %p244
      %p246 = scmp.ne.s32.totalorder %s238, %s241
      %p247 = scmp.eq.s32.totalorder %s20, 0
      %p248 = por %p246, %p247
      %p249 = scmp.ne.s32.totalorder %s238, %s241
      %p250 = scmp.eq.s32.totalorder %s25, 7
      %p251 = por %p249, %p250
      %p252 = scmp.ne.s32.totalorder %s241, %s242
      %p253 = scmp.eq.s32.totalorder %s25, 0
      %p254 = por %p252, %p253
      %p255 = scmp.ne.s32.totalorder %s241, %s242
      %p256 = scmp.eq.s32.totalorder %s26, 7
      %p257 = por %p255, %p256
      %p259 = scmp.ne.s32.totalorder %s242, %s258
      %p260 = scmp.eq.s32.totalorder %s26, 0
      %p261 = por %p259, %p260
      %s262 = ssub.s32 %s27, %s39
      %p263 = scmp.eq.s32.totalorder %s262, 0
      %s265 = sadd.s32 %s264, 1
      %s266 = scalar_select %p263, %s264, %s265
      %p269 = pneg %p263
      %p270 = scmp.eq.s32.totalorder %s20, 7
      %p271 = por %p269, %p270
      %p272 = scmp.ne.s32.totalorder %s264, %s267
      %p273 = scmp.eq.s32.totalorder %s20, 0
      %p274 = por %p272, %p273
      %p275 = scmp.ne.s32.totalorder %s264, %s267
      %p276 = scmp.eq.s32.totalorder %s25, 7
      %p277 = por %p275, %p276
      %p278 = scmp.ne.s32.totalorder %s267, %s268
      %p279 = scmp.eq.s32.totalorder %s25, 0
      %p280 = por %p278, %p279
      %p281 = scmp.ne.s32.totalorder %s267, %s268
      %p282 = scmp.eq.s32.totalorder %s26, 7
      %p283 = por %p281, %p282
      %p285 = scmp.ne.s32.totalorder %s268, %s284
      %p286 = scmp.eq.s32.totalorder %s26, 0
      %p287 = por %p285, %p286
      %p288 = scmp.le.s32.totalorder 1, %s20
      %p289 = scmp.lt.s32.totalorder %s20, 9
      %p290 = pnand %p288, %p289
      %p291 = pneg %p290
      // Predicated region
      $region9: #{_lambda_.1} parent=5 // pred_check
        _
      $region10: #{_lambda_.1} parent=5 // pred_check_branch
        %293 = sbr.rel (%p290) target = $region12
      $region11: #{_lambda_.1} parent=5 // pred_region
        %s294 = ssub.s32 %s20, 1
        // Predicated region
        $region13: #{_lambda_.1} parent=11 // pred_check
          %p295 = pneg %p81
        $region14: #{_lambda_.1} parent=11 // pred_check_branch
          %297 = sbr.rel (%p295) target = $region16
        $region15: #{_lambda_.1} parent=11 // pred_region
          _
        $region16: #{_lambda_.1} parent=11 // pred_fallthru
          _
        // Predicated region
        $region17: #{_lambda_.1} parent=11 // pred_check
          %p298 = pneg %p102
        $region18: #{_lambda_.1} parent=11 // pred_check_branch
          %300 = sbr.rel (%p298) target = $region20
        $region19: #{_lambda_.1} parent=11 // pred_region
          _
        $region20: #{_lambda_.1} parent=11 // pred_fallthru
          _
        // Predicated region
        $region21: #{_lambda_.1} parent=11 // pred_check
          %p301 = pneg %p123
        $region22: #{_lambda_.1} parent=11 // pred_check_branch
          %303 = sbr.rel (%p301) target = $region24
        $region23: #{_lambda_.1} parent=11 // pred_region
          _
        $region24: #{_lambda_.1} parent=11 // pred_fallthru
          _
        // Predicated region
        $region25: #{_lambda_.1} parent=11 // pred_check
          %p304 = pneg %p144
        $region26: #{_lambda_.1} parent=11 // pred_check_branch
          %306 = sbr.rel (%p304) target = $region28
        $region27: #{_lambda_.1} parent=11 // pred_region
          _
        $region28: #{_lambda_.1} parent=11 // pred_fallthru
          _
        // Predicated region
        $region29: #{_lambda_.1} parent=11 // pred_check
          %p307 = pneg %p165
        $region30: #{_lambda_.1} parent=11 // pred_check_branch
          %309 = sbr.rel (%p307) target = $region32
        $region31: #{_lambda_.1} parent=11 // pred_region
          _
        $region32: #{_lambda_.1} parent=11 // pred_fallthru
          _
        // Predicated region
        $region33: #{_lambda_.1} parent=11 // pred_check
          %p310 = pneg %p186
        $region34: #{_lambda_.1} parent=11 // pred_check_branch
          %312 = sbr.rel (%p310) target = $region36
        $region35: #{_lambda_.1} parent=11 // pred_region
          _
        $region36: #{_lambda_.1} parent=11 // pred_fallthru
          _
        // Predicated region
        $region37: #{_lambda_.1} parent=11 // pred_check
          %p313 = pneg %p207
        $region38: #{_lambda_.1} parent=11 // pred_check_branch
          %315 = sbr.rel (%p313) target = $region40
        $region39: #{_lambda_.1} parent=11 // pred_region
          _
        $region40: #{_lambda_.1} parent=11 // pred_fallthru
          _
        // Predicated region
        $region41: #{_lambda_.1} parent=11 // pred_check
          %p316 = pneg %p228
        $region42: #{_lambda_.1} parent=11 // pred_check_branch
          %318 = sbr.rel (%p316) target = $region44
        $region43: #{_lambda_.1} parent=11 // pred_region
          _
        $region44: #{_lambda_.1} parent=11 // pred_fallthru
          _
      $region12: #{_lambda_.1} parent=5 // pred_fallthru
        _
      %p319 = scmp.lt.s32.totalorder %s20, 8
      // Predicated region
      $region45: #{_lambda_.1} parent=5 // pred_check
        %p320 = pneg %p319
      $region46: #{_lambda_.1} parent=5 // pred_check_branch
        %322 = sbr.rel (%p320) target = $region48
      $region47: #{_lambda_.1} parent=5 // pred_region
        // Predicated region
        $region49: #{_lambda_.1} parent=47 // pred_check
          %p323 = pneg %p54
        $region50: #{_lambda_.1} parent=47 // pred_check_branch
          %325 = sbr.rel (%p323) target = $region52
        $region51: #{_lambda_.1} parent=47 // pred_region
          %s326 = smul.u32 8, %s28
          %p327 = scmp.lt.s32.totalorder %s27, 1
          %s328 = scalar_select %p327, %s27, 1
          %p329 = scmp.lt.s32.totalorder %s326, 31
          %s330 = scalar_select %p329, %s326, 31
          %s331 = smul.addr %s328, 32
          %s332 = sadd.s32 %s330, %s331
          %s333 = smul.addr %s332, 4
          %s334 = scalar_lea.vmem %s0, %s333
          %s335 = smul.u32 8, %s28
        $region52: #{_lambda_.1} parent=47 // pred_fallthru
          _
      $region48: #{_lambda_.1} parent=5 // pred_fallthru
        _
      %p336 = scmp.le.s32.totalorder 1, %s20
      %p337 = scmp.lt.s32.totalorder %s20, 9
      %p338 = pnand %p336, %p337
      %p339 = pneg %p338
      // Predicated region
      $region53: #{_lambda_.1} parent=5 // pred_check
        _
      $region54: #{_lambda_.1} parent=5 // pred_check_branch
        %341 = sbr.rel (%p338) target = $region56
      $region55: #{_lambda_.1} parent=5 // pred_region
        %s342 = ssub.s32 %s20, 1
        %s343 = smul.u32 8, %s30
        %p344 = scmp.lt.s32.totalorder %s29, 1
        %s345 = scalar_select %p344, %s29, 1
        %p346 = scmp.lt.s32.totalorder %s343, 31
        %s347 = scalar_select %p346, %s343, 31
        %s348 = smul.addr %s345, 32
        %s349 = sadd.s32 %s347, %s348
        %s350 = smul.addr %s349, 4
        %s351 = scalar_lea.vmem %s0, %s350
        %p352 = pneg %p60
        %p353 = pneg %p57
        %p354 = pneg %p81
        %p355 = pneg %p78
        %p356 = pneg %p102
        %p357 = pneg %p99
        %p358 = pneg %p123
        %p359 = pneg %p120
        %p360 = pneg %p144
        %p361 = pneg %p141
        %p362 = pneg %p165
        %p363 = pneg %p162
        %p364 = pneg %p186
        %p365 = pneg %p183
        %p366 = pneg %p207
        %p367 = pneg %p204
        %p368 = pneg %p228
        %p369 = pneg %p225
        %p370 = pneg %p254
        %p371 = pneg %p251
        %s372 = sand.u32 %s241, 1
        %s373 = scalar_lea.sflag [#allocation4], %s372
        %s374 = sand.u32 %s241, 1
        %s375 = scalar_lea.vmem [#allocation3], %s374
        %p376 = pneg %p280
        %p377 = pneg %p277
        %p378 = scmp.lt.s32.totalorder %s29, 1
        %s379 = scalar_select %p378, %s29, 1
        %s380 = smul.addr %s379, 2
        %s381 = scalar_lea.vmem %s10, %s380
        %s382 = smul.u32 8, %s30
        %p383 = scmp.lt.s32.totalorder %s29, 1
        %s384 = scalar_select %p383, %s29, 1
        %p385 = scmp.lt.s32.totalorder %s382, 31
        %s386 = scalar_select %p385, %s382, 31
        %s387 = smul.addr %s384, 32
        %s388 = sadd.s32 %s386, %s387
        %s389 = smul.addr %s388, 4
        %s390 = scalar_lea.vmem %s0, %s389
        %s391 = smul.u32 8, %s30
        %p392 = scmp.lt.s32.totalorder %s29, 1
        %s393 = scalar_select %p392, %s29, 1
        %s394 = smul.addr %s393, 2
        %s395 = scalar_lea.vmem %s10, %s394
        %v397 = vld [vmem:[%s390] sm:$0xf]
        %v398 = vld [vmem:[%s390 + $0x4] sm:$0xf]
        %v399 = vld [vmem:[%s390 + $0x8] sm:$0xf]
        %v400 = vld [vmem:[%s390 + $0xc] sm:$0xf]
        %v401 = vld [vmem:[%s390 + $0x10] sm:$0xf]
        %v402 = vld [vmem:[%s390 + $0x14] sm:$0xf]
        %v403 = vld [vmem:[%s390 + $0x18] sm:$0xf]
        %v404 = vld [vmem:[%s390 + $0x1c] sm:$0xf]
        %v405 = vld [vmem:[%s1] sm:$0xff]
        %v406 = vld [vmem:[%s1 + $0x8] sm:$0xff]
        %v415 = vunpack.c.l.b16 %v397
        %v416 = vunpack.c.l.b16 %v398
        %v417 = vunpack.c.l.b16 %v399
        %v418 = vunpack.c.l.b16 %v400
        %v419 = vunpack.c.l.b16 %v401
        %v420 = vunpack.c.l.b16 %v402
        %v421 = vunpack.c.l.b16 %v403
        %v422 = vunpack.c.l.b16 %v404
        %v423 = vpack.c.b16 %v416, %v415
        %v424 = vpack.c.b16 %v418, %v417
        %v425 = vpack.c.b16 %v420, %v419
        %v426 = vpack.c.b16 %v422, %v421
        %v429 = vunpack.c.l.b16 %v405
        %v430 = vunpack.c.h.b16 %v405
        %v431 = vunpack.c.l.b16 %v406
        %v432 = vunpack.c.h.b16 %v406
        %v433 = vpack.c.b16 %v431, %v429
        %v434 = vpack.c.b16 %v432, %v430
        %vm437 = vcmask 130048
        %v439 = vsel %vm437, %v423, 0
        %v442 = vsel %vm437, %v424, 0
        %v445 = vsel %vm437, %v425, 0
        %v448 = vsel %vm437, %v426, 0
        %450 = vmatpush.bf16.msra.mxu0 0
        %451 = vmatpush.bf16.msra.mxu0 0
        %452 = vmatpush.bf16.msra.mxu0 0
        %453 = vmatpush.bf16.msra.mxu0 0
        %454 = vmatpush.bf16.msra.mxu0 0
        %455 = vmatpush.bf16.msra.mxu0 0
        %456 = vmatpush.bf16.msra.mxu0 0
        %457 = vmatpush.bf16.msra.mxu0 %v433
        %458 = vmatmul.bf16.gmra.mxu0 %v439
        %v459 = vpop.f32.mrf.mxu0
        %v460 = vadd.f32 0.0, %v459
        %v461 = vpop.f32.mrf.mxu0
        %v462 = vadd.f32 0.0, %v461
        %463 = vmatmul.bf16.gmra.mxu0 %v442
        %v464 = vpop.f32.mrf.mxu0
        %v465 = vadd.f32 0.0, %v464
        %v466 = vpop.f32.mrf.mxu0
        %v467 = vadd.f32 0.0, %v466
        %468 = vmatmul.bf16.gmra.mxu0 %v445
        %v469 = vpop.f32.mrf.mxu0
        %v470 = vadd.f32 0.0, %v469
        %v471 = vpop.f32.mrf.mxu0
        %v472 = vadd.f32 0.0, %v471
        %473 = vmatmul.bf16.gmra.mxu0 %v448
        %v474 = vpop.f32.mrf.mxu0
        %v475 = vadd.f32 0.0, %v474
        %v476 = vpop.f32.mrf.mxu0
        %v477 = vadd.f32 0.0, %v476
        %478 = vdwg.mxu0
        %479 = vmatpush.bf16.msra.mxu0 0
        %480 = vmatpush.bf16.msra.mxu0 0
        %481 = vmatpush.bf16.msra.mxu0 0
        %482 = vmatpush.bf16.msra.mxu0 0
        %483 = vmatpush.bf16.msra.mxu0 0
        %484 = vmatpush.bf16.msra.mxu0 0
        %485 = vmatpush.bf16.msra.mxu0 0
        %486 = vmatpush.bf16.msra.mxu0 %v434
        %487 = vmatmul.bf16.gmra.mxu0 %v439
        %v488 = vpop.f32.mrf.mxu0
        %v489 = vadd.f32 0.0, %v488
        %v490 = vpop.f32.mrf.mxu0
        %v491 = vadd.f32 0.0, %v490
        %492 = vmatmul.bf16.gmra.mxu0 %v442
        %v493 = vpop.f32.mrf.mxu0
        %v494 = vadd.f32 0.0, %v493
        %v495 = vpop.f32.mrf.mxu0
        %v496 = vadd.f32 0.0, %v495
        %497 = vmatmul.bf16.gmra.mxu0 %v445
        %v498 = vpop.f32.mrf.mxu0
        %v499 = vadd.f32 0.0, %v498
        %v500 = vpop.f32.mrf.mxu0
        %v501 = vadd.f32 0.0, %v500
        %502 = vmatmul.bf16.gmra.mxu0 %v448
        %v503 = vpop.f32.mrf.mxu0
        %v504 = vadd.f32 0.0, %v503
        %v505 = vpop.f32.mrf.mxu0
        %v506 = vadd.f32 0.0, %v505
        %507 = vdwg.mxu0
        %v508 = vmax.f32 %v460, %v465
        %v509 = vmax.f32 %v462, %v467
        %v510 = vmax.f32 %v508, %v470
        %v511 = vmax.f32 %v509, %v472
        %v512 = vmax.f32 %v510, %v475
        %v513 = vmax.f32 %v511, %v477
        %v514 = vmax.f32 %v512, %v513
        %v515 = vrot.slane %v514, 4
        %v516 = vmax.f32 %v514, %v515
        %v517 = vrot.slane %v516, 2
        %v518 = vmax.f32 %v516, %v517
        %v519 = vrot.slane %v518, 1
        %v520 = vmax.f32 %v518, %v519
        %v521 = vmax.f32 %v489, %v494
        %v522 = vmax.f32 %v491, %v496
        %v523 = vmax.f32 %v521, %v499
        %v524 = vmax.f32 %v522, %v501
        %v525 = vmax.f32 %v523, %v504
        %v526 = vmax.f32 %v524, %v506
        %v527 = vmax.f32 %v525, %v526
        %v528 = vrot.slane %v527, 4
        %v529 = vmax.f32 %v527, %v528
        %v530 = vrot.slane %v529, 2
        %v531 = vmax.f32 %v529, %v530
        %v532 = vrot.slane %v531, 1
        %v533 = vmax.f32 %v531, %v532
        %p534 = scmp.eq.s32.totalorder %s30, 0
        // Predicated region
        $region57: #{_lambda_.1} parent=55 // pred_check
          %p535 = pneg %p534
        $region58: #{_lambda_.1} parent=55 // pred_check_branch
          %537 = sbr.rel (%p535) target = $region60
        $region59: #{_lambda_.1} parent=55 // pred_region
          %v538 = vlaneseq
          %vm539 = vcmp.ge.s32.totalorder %v538, 0
          %vm540 = vcmp.lt.s32.totalorder %v538, 256
          %vm541 = vmand %vm539, %vm540
          %542 = vst.msk [vmem:[#allocation2] sm:$0x3] %vm541, -inf
        $region60: #{_lambda_.1} parent=55 // pred_fallthru
          _
        %v543 = vld [vmem:[#allocation2] sm:$0x3]
        %v546 = vrot.slane %v533, 7
        %vm547 = vcmask 1040384
        %v548 = vsel %vm547, %v520, %v546
        %v550 = vmax.f32 %v543, %v548
        %v551 = vlaneseq
        %vm552 = vcmp.ge.s32.totalorder %v551, 0
        %vm553 = vcmp.lt.s32.totalorder %v551, 256
        %vm554 = vmand %vm552, %vm553
        %555 = vst.msk [vmem:[#allocation2] sm:$0x3] %vm554, %v550
        %p556 = scmp.eq.s32.totalorder %s30, 3
        // Predicated region
        $region61: #{_lambda_.1} parent=55 // pred_check
          %p557 = pneg %p556
        $region62: #{_lambda_.1} parent=55 // pred_check_branch
          %559 = sbr.rel (%p557) target = $region64
        $region63: #{_lambda_.1} parent=55 // pred_region
          %v560 = vld [vmem:[#allocation2] sm:$0x3]
          %v561 = vld [vmem:[%s2] sm:$0x3]
          %v562 = vadd.f32 %v560, %v561
          %v563 = vmax.f32 %v562, 0.0
          %564 = vst.msk [vmem:[%s395] sm:$0x3] %vm554, %v563
          %v566 = vperm.slane %v563, 0
          %v567 = vperm.slane %v563, 1
          %v570 = vpack.c.bf16 %v566, %v566
          %v571 = vpack.c.bf16 %v567, %v567
          %v572 = vld [vmem:[%s3] sm:$0xff]
          %v573 = vld [vmem:[%s3 + $0x8] sm:$0xff]
          %v574 = vld [vmem:[%s3 + $0x10] sm:$0xff]
          %v575 = vld [vmem:[%s3 + $0x18] sm:$0xff]
          %v576 = vld [vmem:[%s3 + $0x20] sm:$0xff]
          %v577 = vld [vmem:[%s3 + $0x28] sm:$0xff]
          %v578 = vld [vmem:[%s3 + $0x30] sm:$0xff]
          %v579 = vld [vmem:[%s3 + $0x38] sm:$0xff]
          %v580 = vld [vmem:[%s3 + $0x40] sm:$0xff]
          %v581 = vld [vmem:[%s3 + $0x48] sm:$0xff]
          %v582 = vld [vmem:[%s3 + $0x50] sm:$0xff]
          %v583 = vld [vmem:[%s3 + $0x58] sm:$0xff]
          %v584 = vld [vmem:[%s3 + $0x60] sm:$0xff]
          %v585 = vld [vmem:[%s3 + $0x68] sm:$0xff]
          %v586 = vld [vmem:[%s3 + $0x70] sm:$0xff]
          %v587 = vld [vmem:[%s3 + $0x78] sm:$0xff]
          %v588 = vld [vmem:[%s3 + $0x80] sm:$0xff]
          %v589 = vld [vmem:[%s3 + $0x88] sm:$0xff]
          %v590 = vld [vmem:[%s3 + $0x90] sm:$0xff]
          %v591 = vld [vmem:[%s3 + $0x98] sm:$0xff]
          %v592 = vld [vmem:[%s3 + $0xa0] sm:$0xff]
          %v593 = vld [vmem:[%s3 + $0xa8] sm:$0xff]
          %v594 = vld [vmem:[%s3 + $0xb0] sm:$0xff]
          %v595 = vld [vmem:[%s3 + $0xb8] sm:$0xff]
          %v596 = vld [vmem:[%s3 + $0xc0] sm:$0xff]
          %v597 = vld [vmem:[%s3 + $0xc8] sm:$0xff]
          %v598 = vld [vmem:[%s3 + $0xd0] sm:$0xff]
          %v599 = vld [vmem:[%s3 + $0xd8] sm:$0xff]
          %v600 = vld [vmem:[%s3 + $0xe0] sm:$0xff]
          %v601 = vld [vmem:[%s3 + $0xe8] sm:$0xff]
          %v602 = vld [vmem:[%s3 + $0xf0] sm:$0xff]
          %v603 = vld [vmem:[%s3 + $0xf8] sm:$0xff]
          %v604 = vld [vmem:[%s3 + $0x100] sm:$0xff]
          %v605 = vld [vmem:[%s3 + $0x108] sm:$0xff]
          %v606 = vld [vmem:[%s3 + $0x110] sm:$0xff]
          %v607 = vld [vmem:[%s3 + $0x118] sm:$0xff]
          %v608 = vld [vmem:[%s3 + $0x120] sm:$0xff]
          %v609 = vld [vmem:[%s3 + $0x128] sm:$0xff]
          %v610 = vld [vmem:[%s3 + $0x130] sm:$0xff]
          %v611 = vld [vmem:[%s3 + $0x138] sm:$0xff]
          %v612 = vld [vmem:[%s3 + $0x140] sm:$0xff]
          %v613 = vld [vmem:[%s3 + $0x148] sm:$0xff]
          %v614 = vld [vmem:[%s3 + $0x150] sm:$0xff]
          %v615 = vld [vmem:[%s3 + $0x158] sm:$0xff]
          %v616 = vld [vmem:[%s3 + $0x160] sm:$0xff]
          %v617 = vld [vmem:[%s3 + $0x168] sm:$0xff]
          %v618 = vld [vmem:[%s3 + $0x170] sm:$0xff]
          %v619 = vld [vmem:[%s3 + $0x178] sm:$0xff]
          %v620 = vld [vmem:[%s3 + $0x180] sm:$0xff]
          %v621 = vld [vmem:[%s3 + $0x188] sm:$0xff]
          %v622 = vld [vmem:[%s3 + $0x190] sm:$0xff]
          %v623 = vld [vmem:[%s3 + $0x198] sm:$0xff]
          %v624 = vld [vmem:[%s3 + $0x1a0] sm:$0xff]
          %v625 = vld [vmem:[%s3 + $0x1a8] sm:$0xff]
          %v626 = vld [vmem:[%s3 + $0x1b0] sm:$0xff]
          %v627 = vld [vmem:[%s3 + $0x1b8] sm:$0xff]
          %v628 = vld [vmem:[%s3 + $0x1c0] sm:$0xff]
          %v629 = vld [vmem:[%s3 + $0x1c8] sm:$0xff]
          %v630 = vld [vmem:[%s3 + $0x1d0] sm:$0xff]
          %v631 = vld [vmem:[%s3 + $0x1d8] sm:$0xff]
          %v632 = vld [vmem:[%s3 + $0x1e0] sm:$0xff]
          %v633 = vld [vmem:[%s3 + $0x1e8] sm:$0xff]
          %v634 = vld [vmem:[%s3 + $0x1f0] sm:$0xff]
          %v635 = vld [vmem:[%s3 + $0x1f8] sm:$0xff]
          %v636 = vld [vmem:[%s4] sm:$0xf]
          %v701 = vunpack.c.l.b16 %v572
          %v702 = vunpack.c.h.b16 %v572
          %v703 = vunpack.c.l.b16 %v573
          %v704 = vunpack.c.h.b16 %v573
          %v705 = vunpack.c.l.b16 %v574
          %v706 = vunpack.c.h.b16 %v574
          %v707 = vunpack.c.l.b16 %v575
          %v708 = vunpack.c.h.b16 %v575
          %v709 = vunpack.c.l.b16 %v576
          %v710 = vunpack.c.h.b16 %v576
          %v711 = vunpack.c.l.b16 %v577
          %v712 = vunpack.c.h.b16 %v577
          %v713 = vunpack.c.l.b16 %v578
          %v714 = vunpack.c.h.b16 %v578
          %v715 = vunpack.c.l.b16 %v579
          %v716 = vunpack.c.h.b16 %v579
          %v717 = vunpack.c.l.b16 %v580
          %v718 = vunpack.c.h.b16 %v580
          %v719 = vunpack.c.l.b16 %v581
          %v720 = vunpack.c.h.b16 %v581
          %v721 = vunpack.c.l.b16 %v582
          %v722 = vunpack.c.h.b16 %v582
          %v723 = vunpack.c.l.b16 %v583
          %v724 = vunpack.c.h.b16 %v583
          %v725 = vunpack.c.l.b16 %v584
          %v726 = vunpack.c.h.b16 %v584
          %v727 = vunpack.c.l.b16 %v585
          %v728 = vunpack.c.h.b16 %v585
          %v729 = vunpack.c.l.b16 %v586
          %v730 = vunpack.c.h.b16 %v586
          %v731 = vunpack.c.l.b16 %v587
          %v732 = vunpack.c.h.b16 %v587
          %v733 = vunpack.c.l.b16 %v588
          %v734 = vunpack.c.h.b16 %v588
          %v735 = vunpack.c.l.b16 %v589
          %v736 = vunpack.c.h.b16 %v589
          %v737 = vunpack.c.l.b16 %v590
          %v738 = vunpack.c.h.b16 %v590
          %v739 = vunpack.c.l.b16 %v591
          %v740 = vunpack.c.h.b16 %v591
          %v741 = vunpack.c.l.b16 %v592
          %v742 = vunpack.c.h.b16 %v592
          %v743 = vunpack.c.l.b16 %v593
          %v744 = vunpack.c.h.b16 %v593
          %v745 = vunpack.c.l.b16 %v594
          %v746 = vunpack.c.h.b16 %v594
          %v747 = vunpack.c.l.b16 %v595
          %v748 = vunpack.c.h.b16 %v595
          %v749 = vunpack.c.l.b16 %v596
          %v750 = vunpack.c.h.b16 %v596
          %v751 = vunpack.c.l.b16 %v597
          %v752 = vunpack.c.h.b16 %v597
          %v753 = vunpack.c.l.b16 %v598
          %v754 = vunpack.c.h.b16 %v598
          %v755 = vunpack.c.l.b16 %v599
          %v756 = vunpack.c.h.b16 %v599
          %v757 = vunpack.c.l.b16 %v600
          %v758 = vunpack.c.h.b16 %v600
          %v759 = vunpack.c.l.b16 %v601
          %v760 = vunpack.c.h.b16 %v601
          %v761 = vunpack.c.l.b16 %v602
          %v762 = vunpack.c.h.b16 %v602
          %v763 = vunpack.c.l.b16 %v603
          %v764 = vunpack.c.h.b16 %v603
          %v765 = vunpack.c.l.b16 %v604
          %v766 = vunpack.c.h.b16 %v604
          %v767 = vunpack.c.l.b16 %v605
          %v768 = vunpack.c.h.b16 %v605
          %v769 = vunpack.c.l.b16 %v606
          %v770 = vunpack.c.h.b16 %v606
          %v771 = vunpack.c.l.b16 %v607
          %v772 = vunpack.c.h.b16 %v607
          %v773 = vunpack.c.l.b16 %v608
          %v774 = vunpack.c.h.b16 %v608
          %v775 = vunpack.c.l.b16 %v609
          %v776 = vunpack.c.h.b16 %v609
          %v777 = vunpack.c.l.b16 %v610
          %v778 = vunpack.c.h.b16 %v610
          %v779 = vunpack.c.l.b16 %v611
          %v780 = vunpack.c.h.b16 %v611
          %v781 = vunpack.c.l.b16 %v612
          %v782 = vunpack.c.h.b16 %v612
          %v783 = vunpack.c.l.b16 %v613
          %v784 = vunpack.c.h.b16 %v613
          %v785 = vunpack.c.l.b16 %v614
          %v786 = vunpack.c.h.b16 %v614
          %v787 = vunpack.c.l.b16 %v615
          %v788 = vunpack.c.h.b16 %v615
          %v789 = vunpack.c.l.b16 %v616
          %v790 = vunpack.c.h.b16 %v616
          %v791 = vunpack.c.l.b16 %v617
          %v792 = vunpack.c.h.b16 %v617
          %v793 = vunpack.c.l.b16 %v618
          %v794 = vunpack.c.h.b16 %v618
          %v795 = vunpack.c.l.b16 %v619
          %v796 = vunpack.c.h.b16 %v619
          %v797 = vunpack.c.l.b16 %v620
          %v798 = vunpack.c.h.b16 %v620
          %v799 = vunpack.c.l.b16 %v621
          %v800 = vunpack.c.h.b16 %v621
          %v801 = vunpack.c.l.b16 %v622
          %v802 = vunpack.c.h.b16 %v622
          %v803 = vunpack.c.l.b16 %v623
          %v804 = vunpack.c.h.b16 %v623
          %v805 = vunpack.c.l.b16 %v624
          %v806 = vunpack.c.h.b16 %v624
          %v807 = vunpack.c.l.b16 %v625
          %v808 = vunpack.c.h.b16 %v625
          %v809 = vunpack.c.l.b16 %v626
          %v810 = vunpack.c.h.b16 %v626
          %v811 = vunpack.c.l.b16 %v627
          %v812 = vunpack.c.h.b16 %v627
          %v813 = vunpack.c.l.b16 %v628
          %v814 = vunpack.c.h.b16 %v628
          %v815 = vunpack.c.l.b16 %v629
          %v816 = vunpack.c.h.b16 %v629
          %v817 = vunpack.c.l.b16 %v630
          %v818 = vunpack.c.h.b16 %v630
          %v819 = vunpack.c.l.b16 %v631
          %v820 = vunpack.c.h.b16 %v631
          %v821 = vunpack.c.l.b16 %v632
          %v822 = vunpack.c.h.b16 %v632
          %v823 = vunpack.c.l.b16 %v633
          %v824 = vunpack.c.h.b16 %v633
          %v825 = vunpack.c.l.b16 %v634
          %v826 = vunpack.c.h.b16 %v634
          %v827 = vunpack.c.l.b16 %v635
          %v828 = vunpack.c.h.b16 %v635
          %v829 = vpack.c.b16 %v705, %v701
          %v830 = vpack.c.b16 %v706, %v702
          %v831 = vpack.c.b16 %v707, %v703
          %v832 = vpack.c.b16 %v708, %v704
          %v833 = vpack.c.b16 %v713, %v709
          %v834 = vpack.c.b16 %v714, %v710
          %v835 = vpack.c.b16 %v715, %v711
          %v836 = vpack.c.b16 %v716, %v712
          %v837 = vpack.c.b16 %v721, %v717
          %v838 = vpack.c.b16 %v722, %v718
          %v839 = vpack.c.b16 %v723, %v719
          %v840 = vpack.c.b16 %v724, %v720
          %v841 = vpack.c.b16 %v729, %v725
          %v842 = vpack.c.b16 %v730, %v726
          %v843 = vpack.c.b16 %v731, %v727
          %v844 = vpack.c.b16 %v732, %v728
          %v845 = vpack.c.b16 %v737, %v733
          %v846 = vpack.c.b16 %v738, %v734
          %v847 = vpack.c.b16 %v739, %v735
          %v848 = vpack.c.b16 %v740, %v736
          %v849 = vpack.c.b16 %v745, %v741
          %v850 = vpack.c.b16 %v746, %v742
          %v851 = vpack.c.b16 %v747, %v743
          %v852 = vpack.c.b16 %v748, %v744
          %v853 = vpack.c.b16 %v753, %v749
          %v854 = vpack.c.b16 %v754, %v750
          %v855 = vpack.c.b16 %v755, %v751
          %v856 = vpack.c.b16 %v756, %v752
          %v857 = vpack.c.b16 %v761, %v757
          %v858 = vpack.c.b16 %v762, %v758
          %v859 = vpack.c.b16 %v763, %v759
          %v860 = vpack.c.b16 %v764, %v760
          %v861 = vpack.c.b16 %v769, %v765
          %v862 = vpack.c.b16 %v770, %v766
          %v863 = vpack.c.b16 %v771, %v767
          %v864 = vpack.c.b16 %v772, %v768
          %v865 = vpack.c.b16 %v777, %v773
          %v866 = vpack.c.b16 %v778, %v774
          %v867 = vpack.c.b16 %v779, %v775
          %v868 = vpack.c.b16 %v780, %v776
          %v869 = vpack.c.b16 %v785, %v781
          %v870 = vpack.c.b16 %v786, %v782
          %v871 = vpack.c.b16 %v787, %v783
          %v872 = vpack.c.b16 %v788, %v784
          %v873 = vpack.c.b16 %v793, %v789
          %v874 = vpack.c.b16 %v794, %v790
          %v875 = vpack.c.b16 %v795, %v791
          %v876 = vpack.c.b16 %v796, %v792
          %v877 = vpack.c.b16 %v801, %v797
          %v878 = vpack.c.b16 %v802, %v798
          %v879 = vpack.c.b16 %v803, %v799
          %v880 = vpack.c.b16 %v804, %v800
          %v881 = vpack.c.b16 %v809, %v805
          %v882 = vpack.c.b16 %v810, %v806
          %v883 = vpack.c.b16 %v811, %v807
          %v884 = vpack.c.b16 %v812, %v808
          %v885 = vpack.c.b16 %v817, %v813
          %v886 = vpack.c.b16 %v818, %v814
          %v887 = vpack.c.b16 %v819, %v815
          %v888 = vpack.c.b16 %v820, %v816
          %v889 = vpack.c.b16 %v825, %v821
          %v890 = vpack.c.b16 %v826, %v822
          %v891 = vpack.c.b16 %v827, %v823
          %v892 = vpack.c.b16 %v828, %v824
          %v958 = vperm.slane %v636, 0
          %v959 = vperm.slane %v636, 1
          %v960 = vperm.slane %v636, 2
          %v961 = vperm.slane %v636, 3
          %966 = vmatpush.bf16.msra.mxu0 %v857
          %967 = vmatpush.bf16.msra.mxu0 %v853
          %968 = vmatpush.bf16.msra.mxu0 %v849
          %969 = vmatpush.bf16.msra.mxu0 %v845
          %970 = vmatpush.bf16.msra.mxu0 %v841
          %971 = vmatpush.bf16.msra.mxu0 %v837
          %972 = vmatpush.bf16.msra.mxu0 %v833
          %973 = vmatpush.bf16.msra.mxu0 %v829
          %974 = vmatmul.bf16.gmra.mxu0 %v570
          %v975 = vpop.f32.mrf.mxu0
          %v976 = vadd.f32 %v958, %v975
          %v977 = vpop.f32.mrf.mxu0
          %978 = vdwg.mxu0
          %979 = vmatpush.bf16.msra.mxu0 %v889
          %980 = vmatpush.bf16.msra.mxu0 %v885
          %981 = vmatpush.bf16.msra.mxu0 %v881
          %982 = vmatpush.bf16.msra.mxu0 %v877
          %983 = vmatpush.bf16.msra.mxu0 %v873
          %984 = vmatpush.bf16.msra.mxu0 %v869
          %985 = vmatpush.bf16.msra.mxu0 %v865
          %986 = vmatpush.bf16.msra.mxu0 %v861
          %987 = vmatmul.bf16.gmra.mxu0 %v571
          %v988 = vpop.f32.mrf.mxu0
          %v989 = vadd.f32 %v976, %v988
          %v990 = vpop.f32.mrf.mxu0
          %991 = vdwg.mxu0
          %992 = vmatpush.bf16.msra.mxu0 %v858
          %993 = vmatpush.bf16.msra.mxu0 %v854
          %994 = vmatpush.bf16.msra.mxu0 %v850
          %995 = vmatpush.bf16.msra.mxu0 %v846
          %996 = vmatpush.bf16.msra.mxu0 %v842
          %997 = vmatpush.bf16.msra.mxu0 %v838
          %998 = vmatpush.bf16.msra.mxu0 %v834
          %999 = vmatpush.bf16.msra.mxu0 %v830
          %1000 = vmatmul.bf16.gmra.mxu0 %v570
          %v1001 = vpop.f32.mrf.mxu0
          %v1002 = vadd.f32 %v959, %v1001
          %v1003 = vpop.f32.mrf.mxu0
          %1004 = vdwg.mxu0
          %1005 = vmatpush.bf16.msra.mxu0 %v890
          %1006 = vmatpush.bf16.msra.mxu0 %v886
          %1007 = vmatpush.bf16.msra.mxu0 %v882
          %1008 = vmatpush.bf16.msra.mxu0 %v878
          %1009 = vmatpush.bf16.msra.mxu0 %v874
          %1010 = vmatpush.bf16.msra.mxu0 %v870
          %1011 = vmatpush.bf16.msra.mxu0 %v866
          %1012 = vmatpush.bf16.msra.mxu0 %v862
          %1013 = vmatmul.bf16.gmra.mxu0 %v571
          %v1014 = vpop.f32.mrf.mxu0
          %v1015 = vadd.f32 %v1002, %v1014
          %v1016 = vpop.f32.mrf.mxu0
          %1017 = vdwg.mxu0
          %1018 = vmatpush.bf16.msra.mxu0 %v859
          %1019 = vmatpush.bf16.msra.mxu0 %v855
          %1020 = vmatpush.bf16.msra.mxu0 %v851
          %1021 = vmatpush.bf16.msra.mxu0 %v847
          %1022 = vmatpush.bf16.msra.mxu0 %v843
          %1023 = vmatpush.bf16.msra.mxu0 %v839
          %1024 = vmatpush.bf16.msra.mxu0 %v835
          %1025 = vmatpush.bf16.msra.mxu0 %v831
          %1026 = vmatmul.bf16.gmra.mxu0 %v570
          %v1027 = vpop.f32.mrf.mxu0
          %v1028 = vadd.f32 %v960, %v1027
          %v1029 = vpop.f32.mrf.mxu0
          %1030 = vdwg.mxu0
          %1031 = vmatpush.bf16.msra.mxu0 %v891
          %1032 = vmatpush.bf16.msra.mxu0 %v887
          %1033 = vmatpush.bf16.msra.mxu0 %v883
          %1034 = vmatpush.bf16.msra.mxu0 %v879
          %1035 = vmatpush.bf16.msra.mxu0 %v875
          %1036 = vmatpush.bf16.msra.mxu0 %v871
          %1037 = vmatpush.bf16.msra.mxu0 %v867
          %1038 = vmatpush.bf16.msra.mxu0 %v863
          %1039 = vmatmul.bf16.gmra.mxu0 %v571
          %v1040 = vpop.f32.mrf.mxu0
          %v1041 = vadd.f32 %v1028, %v1040
          %v1042 = vpop.f32.mrf.mxu0
          %1043 = vdwg.mxu0
          %1044 = vmatpush.bf16.msra.mxu0 %v860
          %1045 = vmatpush.bf16.msra.mxu0 %v856
          %1046 = vmatpush.bf16.msra.mxu0 %v852
          %1047 = vmatpush.bf16.msra.mxu0 %v848
          %1048 = vmatpush.bf16.msra.mxu0 %v844
          %1049 = vmatpush.bf16.msra.mxu0 %v840
          %1050 = vmatpush.bf16.msra.mxu0 %v836
          %1051 = vmatpush.bf16.msra.mxu0 %v832
          %1052 = vmatmul.bf16.gmra.mxu0 %v570
          %v1053 = vpop.f32.mrf.mxu0
          %v1054 = vadd.f32 %v961, %v1053
          %v1055 = vpop.f32.mrf.mxu0
          %1056 = vdwg.mxu0
          %1057 = vmatpush.bf16.msra.mxu0 %v892
          %1058 = vmatpush.bf16.msra.mxu0 %v888
          %1059 = vmatpush.bf16.msra.mxu0 %v884
          %1060 = vmatpush.bf16.msra.mxu0 %v880
          %1061 = vmatpush.bf16.msra.mxu0 %v876
          %1062 = vmatpush.bf16.msra.mxu0 %v872
          %1063 = vmatpush.bf16.msra.mxu0 %v868
          %1064 = vmatpush.bf16.msra.mxu0 %v864
          %1065 = vmatmul.bf16.gmra.mxu0 %v571
          %v1066 = vpop.f32.mrf.mxu0
          %v1067 = vadd.f32 %v1054, %v1066
          %v1068 = vpop.f32.mrf.mxu0
          %1069 = vdwg.mxu0
          %v1070 = vmax.f32 %v989, 0.0
          %v1071 = vmax.f32 %v1015, 0.0
          %v1072 = vmax.f32 %v1041, 0.0
          %v1073 = vmax.f32 %v1067, 0.0
          %v1074 = vpack.c.bf16 %v1070, %v1070
          %v1075 = vpack.c.bf16 %v1071, %v1071
          %v1076 = vpack.c.bf16 %v1072, %v1072
          %v1077 = vpack.c.bf16 %v1073, %v1073
          %v1078 = vld [vmem:[%s5] sm:$0xff]
          %v1079 = vld [vmem:[%s5 + $0x8] sm:$0xff]
          %v1080 = vld [vmem:[%s5 + $0x10] sm:$0xff]
          %v1081 = vld [vmem:[%s5 + $0x18] sm:$0xff]
          %v1082 = vld [vmem:[%s5 + $0x20] sm:$0xff]
          %v1083 = vld [vmem:[%s5 + $0x28] sm:$0xff]
          %v1084 = vld [vmem:[%s5 + $0x30] sm:$0xff]
          %v1085 = vld [vmem:[%s5 + $0x38] sm:$0xff]
          %v1086 = vld [vmem:[%s5 + $0x40] sm:$0xff]
          %v1087 = vld [vmem:[%s5 + $0x48] sm:$0xff]
          %v1088 = vld [vmem:[%s5 + $0x50] sm:$0xff]
          %v1089 = vld [vmem:[%s5 + $0x58] sm:$0xff]
          %v1090 = vld [vmem:[%s5 + $0x60] sm:$0xff]
          %v1091 = vld [vmem:[%s5 + $0x68] sm:$0xff]
          %v1092 = vld [vmem:[%s5 + $0x70] sm:$0xff]
          %v1093 = vld [vmem:[%s5 + $0x78] sm:$0xff]
          %v1094 = vld [vmem:[%s5 + $0x80] sm:$0xff]
          %v1095 = vld [vmem:[%s5 + $0x88] sm:$0xff]
          %v1096 = vld [vmem:[%s5 + $0x90] sm:$0xff]
          %v1097 = vld [vmem:[%s5 + $0x98] sm:$0xff]
          %v1098 = vld [vmem:[%s5 + $0xa0] sm:$0xff]
          %v1099 = vld [vmem:[%s5 + $0xa8] sm:$0xff]
          %v1100 = vld [vmem:[%s5 + $0xb0] sm:$0xff]
          %v1101 = vld [vmem:[%s5 + $0xb8] sm:$0xff]
          %v1102 = vld [vmem:[%s5 + $0xc0] sm:$0xff]
          %v1103 = vld [vmem:[%s5 + $0xc8] sm:$0xff]
          %v1104 = vld [vmem:[%s5 + $0xd0] sm:$0xff]
          %v1105 = vld [vmem:[%s5 + $0xd8] sm:$0xff]
          %v1106 = vld [vmem:[%s5 + $0xe0] sm:$0xff]
          %v1107 = vld [vmem:[%s5 + $0xe8] sm:$0xff]
          %v1108 = vld [vmem:[%s5 + $0xf0] sm:$0xff]
          %v1109 = vld [vmem:[%s5 + $0xf8] sm:$0xff]
          %v1110 = vld [vmem:[%s5 + $0x100] sm:$0xff]
          %v1111 = vld [vmem:[%s5 + $0x108] sm:$0xff]
          %v1112 = vld [vmem:[%s5 + $0x110] sm:$0xff]
          %v1113 = vld [vmem:[%s5 + $0x118] sm:$0xff]
          %v1114 = vld [vmem:[%s5 + $0x120] sm:$0xff]
          %v1115 = vld [vmem:[%s5 + $0x128] sm:$0xff]
          %v1116 = vld [vmem:[%s5 + $0x130] sm:$0xff]
          %v1117 = vld [vmem:[%s5 + $0x138] sm:$0xff]
          %v1118 = vld [vmem:[%s5 + $0x140] sm:$0xff]
          %v1119 = vld [vmem:[%s5 + $0x148] sm:$0xff]
          %v1120 = vld [vmem:[%s5 + $0x150] sm:$0xff]
          %v1121 = vld [vmem:[%s5 + $0x158] sm:$0xff]
          %v1122 = vld [vmem:[%s5 + $0x160] sm:$0xff]
          %v1123 = vld [vmem:[%s5 + $0x168] sm:$0xff]
          %v1124 = vld [vmem:[%s5 + $0x170] sm:$0xff]
          %v1125 = vld [vmem:[%s5 + $0x178] sm:$0xff]
          %v1126 = vld [vmem:[%s5 + $0x180] sm:$0xff]
          %v1127 = vld [vmem:[%s5 + $0x188] sm:$0xff]
          %v1128 = vld [vmem:[%s5 + $0x190] sm:$0xff]
          %v1129 = vld [vmem:[%s5 + $0x198] sm:$0xff]
          %v1130 = vld [vmem:[%s5 + $0x1a0] sm:$0xff]
          %v1131 = vld [vmem:[%s5 + $0x1a8] sm:$0xff]
          %v1132 = vld [vmem:[%s5 + $0x1b0] sm:$0xff]
          %v1133 = vld [vmem:[%s5 + $0x1b8] sm:$0xff]
          %v1134 = vld [vmem:[%s5 + $0x1c0] sm:$0xff]
          %v1135 = vld [vmem:[%s5 + $0x1c8] sm:$0xff]
          %v1136 = vld [vmem:[%s5 + $0x1d0] sm:$0xff]
          %v1137 = vld [vmem:[%s5 + $0x1d8] sm:$0xff]
          %v1138 = vld [vmem:[%s5 + $0x1e0] sm:$0xff]
          %v1139 = vld [vmem:[%s5 + $0x1e8] sm:$0xff]
          %v1140 = vld [vmem:[%s5 + $0x1f0] sm:$0xff]
          %v1141 = vld [vmem:[%s5 + $0x1f8] sm:$0xff]
          %v1142 = vld [vmem:[%s6] sm:$0x3]
          %v1207 = vunpack.c.l.b16 %v1078
          %v1208 = vunpack.c.h.b16 %v1078
          %v1209 = vunpack.c.l.b16 %v1079
          %v1210 = vunpack.c.h.b16 %v1079
          %v1211 = vunpack.c.l.b16 %v1080
          %v1212 = vunpack.c.h.b16 %v1080
          %v1213 = vunpack.c.l.b16 %v1081
          %v1214 = vunpack.c.h.b16 %v1081
          %v1215 = vunpack.c.l.b16 %v1082
          %v1216 = vunpack.c.h.b16 %v1082
          %v1217 = vunpack.c.l.b16 %v1083
          %v1218 = vunpack.c.h.b16 %v1083
          %v1219 = vunpack.c.l.b16 %v1084
          %v1220 = vunpack.c.h.b16 %v1084
          %v1221 = vunpack.c.l.b16 %v1085
          %v1222 = vunpack.c.h.b16 %v1085
          %v1223 = vunpack.c.l.b16 %v1086
          %v1224 = vunpack.c.h.b16 %v1086
          %v1225 = vunpack.c.l.b16 %v1087
          %v1226 = vunpack.c.h.b16 %v1087
          %v1227 = vunpack.c.l.b16 %v1088
          %v1228 = vunpack.c.h.b16 %v1088
          %v1229 = vunpack.c.l.b16 %v1089
          %v1230 = vunpack.c.h.b16 %v1089
          %v1231 = vunpack.c.l.b16 %v1090
          %v1232 = vunpack.c.h.b16 %v1090
          %v1233 = vunpack.c.l.b16 %v1091
          %v1234 = vunpack.c.h.b16 %v1091
          %v1235 = vunpack.c.l.b16 %v1092
          %v1236 = vunpack.c.h.b16 %v1092
          %v1237 = vunpack.c.l.b16 %v1093
          %v1238 = vunpack.c.h.b16 %v1093
          %v1239 = vunpack.c.l.b16 %v1094
          %v1240 = vunpack.c.h.b16 %v1094
          %v1241 = vunpack.c.l.b16 %v1095
          %v1242 = vunpack.c.h.b16 %v1095
          %v1243 = vunpack.c.l.b16 %v1096
          %v1244 = vunpack.c.h.b16 %v1096
          %v1245 = vunpack.c.l.b16 %v1097
          %v1246 = vunpack.c.h.b16 %v1097
          %v1247 = vunpack.c.l.b16 %v1098
          %v1248 = vunpack.c.h.b16 %v1098
          %v1249 = vunpack.c.l.b16 %v1099
          %v1250 = vunpack.c.h.b16 %v1099
          %v1251 = vunpack.c.l.b16 %v1100
          %v1252 = vunpack.c.h.b16 %v1100
          %v1253 = vunpack.c.l.b16 %v1101
          %v1254 = vunpack.c.h.b16 %v1101
          %v1255 = vunpack.c.l.b16 %v1102
          %v1256 = vunpack.c.h.b16 %v1102
          %v1257 = vunpack.c.l.b16 %v1103
          %v1258 = vunpack.c.h.b16 %v1103
          %v1259 = vunpack.c.l.b16 %v1104
          %v1260 = vunpack.c.h.b16 %v1104
          %v1261 = vunpack.c.l.b16 %v1105
          %v1262 = vunpack.c.h.b16 %v1105
          %v1263 = vunpack.c.l.b16 %v1106
          %v1264 = vunpack.c.h.b16 %v1106
          %v1265 = vunpack.c.l.b16 %v1107
          %v1266 = vunpack.c.h.b16 %v1107
          %v1267 = vunpack.c.l.b16 %v1108
          %v1268 = vunpack.c.h.b16 %v1108
          %v1269 = vunpack.c.l.b16 %v1109
          %v1270 = vunpack.c.h.b16 %v1109
          %v1271 = vunpack.c.l.b16 %v1110
          %v1272 = vunpack.c.h.b16 %v1110
          %v1273 = vunpack.c.l.b16 %v1111
          %v1274 = vunpack.c.h.b16 %v1111
          %v1275 = vunpack.c.l.b16 %v1112
          %v1276 = vunpack.c.h.b16 %v1112
          %v1277 = vunpack.c.l.b16 %v1113
          %v1278 = vunpack.c.h.b16 %v1113
          %v1279 = vunpack.c.l.b16 %v1114
          %v1280 = vunpack.c.h.b16 %v1114
          %v1281 = vunpack.c.l.b16 %v1115
          %v1282 = vunpack.c.h.b16 %v1115
          %v1283 = vunpack.c.l.b16 %v1116
          %v1284 = vunpack.c.h.b16 %v1116
          %v1285 = vunpack.c.l.b16 %v1117
          %v1286 = vunpack.c.h.b16 %v1117
          %v1287 = vunpack.c.l.b16 %v1118
          %v1288 = vunpack.c.h.b16 %v1118
          %v1289 = vunpack.c.l.b16 %v1119
          %v1290 = vunpack.c.h.b16 %v1119
          %v1291 = vunpack.c.l.b16 %v1120
          %v1292 = vunpack.c.h.b16 %v1120
          %v1293 = vunpack.c.l.b16 %v1121
          %v1294 = vunpack.c.h.b16 %v1121
          %v1295 = vunpack.c.l.b16 %v1122
          %v1296 = vunpack.c.h.b16 %v1122
          %v1297 = vunpack.c.l.b16 %v1123
          %v1298 = vunpack.c.h.b16 %v1123
          %v1299 = vunpack.c.l.b16 %v1124
          %v1300 = vunpack.c.h.b16 %v1124
          %v1301 = vunpack.c.l.b16 %v1125
          %v1302 = vunpack.c.h.b16 %v1125
          %v1303 = vunpack.c.l.b16 %v1126
          %v1304 = vunpack.c.h.b16 %v1126
          %v1305 = vunpack.c.l.b16 %v1127
          %v1306 = vunpack.c.h.b16 %v1127
          %v1307 = vunpack.c.l.b16 %v1128
          %v1308 = vunpack.c.h.b16 %v1128
          %v1309 = vunpack.c.l.b16 %v1129
          %v1310 = vunpack.c.h.b16 %v1129
          %v1311 = vunpack.c.l.b16 %v1130
          %v1312 = vunpack.c.h.b16 %v1130
          %v1313 = vunpack.c.l.b16 %v1131
          %v1314 = vunpack.c.h.b16 %v1131
          %v1315 = vunpack.c.l.b16 %v1132
          %v1316 = vunpack.c.h.b16 %v1132
          %v1317 = vunpack.c.l.b16 %v1133
          %v1318 = vunpack.c.h.b16 %v1133
          %v1319 = vunpack.c.l.b16 %v1134
          %v1320 = vunpack.c.h.b16 %v1134
          %v1321 = vunpack.c.l.b16 %v1135
          %v1322 = vunpack.c.h.b16 %v1135
          %v1323 = vunpack.c.l.b16 %v1136
          %v1324 = vunpack.c.h.b16 %v1136
          %v1325 = vunpack.c.l.b16 %v1137
          %v1326 = vunpack.c.h.b16 %v1137
          %v1327 = vunpack.c.l.b16 %v1138
          %v1328 = vunpack.c.h.b16 %v1138
          %v1329 = vunpack.c.l.b16 %v1139
          %v1330 = vunpack.c.h.b16 %v1139
          %v1331 = vunpack.c.l.b16 %v1140
          %v1332 = vunpack.c.h.b16 %v1140
          %v1333 = vunpack.c.l.b16 %v1141
          %v1334 = vunpack.c.h.b16 %v1141
          %v1335 = vpack.c.b16 %v1209, %v1207
          %v1336 = vpack.c.b16 %v1210, %v1208
          %v1337 = vpack.c.b16 %v1213, %v1211
          %v1338 = vpack.c.b16 %v1214, %v1212
          %v1339 = vpack.c.b16 %v1217, %v1215
          %v1340 = vpack.c.b16 %v1218, %v1216
          %v1341 = vpack.c.b16 %v1221, %v1219
          %v1342 = vpack.c.b16 %v1222, %v1220
          %v1343 = vpack.c.b16 %v1225, %v1223
          %v1344 = vpack.c.b16 %v1226, %v1224
          %v1345 = vpack.c.b16 %v1229, %v1227
          %v1346 = vpack.c.b16 %v1230, %v1228
          %v1347 = vpack.c.b16 %v1233, %v1231
          %v1348 = vpack.c.b16 %v1234, %v1232
          %v1349 = vpack.c.b16 %v1237, %v1235
          %v1350 = vpack.c.b16 %v1238, %v1236
          %v1351 = vpack.c.b16 %v1241, %v1239
          %v1352 = vpack.c.b16 %v1242, %v1240
          %v1353 = vpack.c.b16 %v1245, %v1243
          %v1354 = vpack.c.b16 %v1246, %v1244
          %v1355 = vpack.c.b16 %v1249, %v1247
          %v1356 = vpack.c.b16 %v1250, %v1248
          %v1357 = vpack.c.b16 %v1253, %v1251
          %v1358 = vpack.c.b16 %v1254, %v1252
          %v1359 = vpack.c.b16 %v1257, %v1255
          %v1360 = vpack.c.b16 %v1258, %v1256
          %v1361 = vpack.c.b16 %v1261, %v1259
          %v1362 = vpack.c.b16 %v1262, %v1260
          %v1363 = vpack.c.b16 %v1265, %v1263
          %v1364 = vpack.c.b16 %v1266, %v1264
          %v1365 = vpack.c.b16 %v1269, %v1267
          %v1366 = vpack.c.b16 %v1270, %v1268
          %v1367 = vpack.c.b16 %v1273, %v1271
          %v1368 = vpack.c.b16 %v1274, %v1272
          %v1369 = vpack.c.b16 %v1277, %v1275
          %v1370 = vpack.c.b16 %v1278, %v1276
          %v1371 = vpack.c.b16 %v1281, %v1279
          %v1372 = vpack.c.b16 %v1282, %v1280
          %v1373 = vpack.c.b16 %v1285, %v1283
          %v1374 = vpack.c.b16 %v1286, %v1284
          %v1375 = vpack.c.b16 %v1289, %v1287
          %v1376 = vpack.c.b16 %v1290, %v1288
          %v1377 = vpack.c.b16 %v1293, %v1291
          %v1378 = vpack.c.b16 %v1294, %v1292
          %v1379 = vpack.c.b16 %v1297, %v1295
          %v1380 = vpack.c.b16 %v1298, %v1296
          %v1381 = vpack.c.b16 %v1301, %v1299
          %v1382 = vpack.c.b16 %v1302, %v1300
          %v1383 = vpack.c.b16 %v1305, %v1303
          %v1384 = vpack.c.b16 %v1306, %v1304
          %v1385 = vpack.c.b16 %v1309, %v1307
          %v1386 = vpack.c.b16 %v1310, %v1308
          %v1387 = vpack.c.b16 %v1313, %v1311
          %v1388 = vpack.c.b16 %v1314, %v1312
          %v1389 = vpack.c.b16 %v1317, %v1315
          %v1390 = vpack.c.b16 %v1318, %v1316
          %v1391 = vpack.c.b16 %v1321, %v1319
          %v1392 = vpack.c.b16 %v1322, %v1320
          %v1393 = vpack.c.b16 %v1325, %v1323
          %v1394 = vpack.c.b16 %v1326, %v1324
          %v1395 = vpack.c.b16 %v1329, %v1327
          %v1396 = vpack.c.b16 %v1330, %v1328
          %v1397 = vpack.c.b16 %v1333, %v1331
          %v1398 = vpack.c.b16 %v1334, %v1332
          %v1464 = vperm.slane %v1142, 0
          %v1465 = vperm.slane %v1142, 1
          %1468 = vmatpush.bf16.msra.mxu0 %v1349
          %1469 = vmatpush.bf16.msra.mxu0 %v1347
          %1470 = vmatpush.bf16.msra.mxu0 %v1345
          %1471 = vmatpush.bf16.msra.mxu0 %v1343
          %1472 = vmatpush.bf16.msra.mxu0 %v1341
          %1473 = vmatpush.bf16.msra.mxu0 %v1339
          %1474 = vmatpush.bf16.msra.mxu0 %v1337
          %1475 = vmatpush.bf16.msra.mxu0 %v1335
          %1476 = vmatmul.bf16.gmra.mxu0 %v1074
          %v1477 = vpop.f32.mrf.mxu0
          %v1478 = vadd.f32 %v1464, %v1477
          %v1479 = vpop.f32.mrf.mxu0
          %1480 = vdwg.mxu0
          %1481 = vmatpush.bf16.msra.mxu0 %v1365
          %1482 = vmatpush.bf16.msra.mxu0 %v1363
          %1483 = vmatpush.bf16.msra.mxu0 %v1361
          %1484 = vmatpush.bf16.msra.mxu0 %v1359
          %1485 = vmatpush.bf16.msra.mxu0 %v1357
          %1486 = vmatpush.bf16.msra.mxu0 %v1355
          %1487 = vmatpush.bf16.msra.mxu0 %v1353
          %1488 = vmatpush.bf16.msra.mxu0 %v1351
          %1489 = vmatmul.bf16.gmra.mxu0 %v1075
          %v1490 = vpop.f32.mrf.mxu0
          %v1491 = vadd.f32 %v1478, %v1490
          %v1492 = vpop.f32.mrf.mxu0
          %1493 = vdwg.mxu0
          %1494 = vmatpush.bf16.msra.mxu0 %v1381
          %1495 = vmatpush.bf16.msra.mxu0 %v1379
          %1496 = vmatpush.bf16.msra.mxu0 %v1377
          %1497 = vmatpush.bf16.msra.mxu0 %v1375
          %1498 = vmatpush.bf16.msra.mxu0 %v1373
          %1499 = vmatpush.bf16.msra.mxu0 %v1371
          %1500 = vmatpush.bf16.msra.mxu0 %v1369
          %1501 = vmatpush.bf16.msra.mxu0 %v1367
          %1502 = vmatmul.bf16.gmra.mxu0 %v1076
          %v1503 = vpop.f32.mrf.mxu0
          %v1504 = vadd.f32 %v1491, %v1503
          %v1505 = vpop.f32.mrf.mxu0
          %1506 = vdwg.mxu0
          %1507 = vmatpush.bf16.msra.mxu0 %v1397
          %1508 = vmatpush.bf16.msra.mxu0 %v1395
          %1509 = vmatpush.bf16.msra.mxu0 %v1393
          %1510 = vmatpush.bf16.msra.mxu0 %v1391
          %1511 = vmatpush.bf16.msra.mxu0 %v1389
          %1512 = vmatpush.bf16.msra.mxu0 %v1387
          %1513 = vmatpush.bf16.msra.mxu0 %v1385
          %1514 = vmatpush.bf16.msra.mxu0 %v1383
          %1515 = vmatmul.bf16.gmra.mxu0 %v1077
          %v1516 = vpop.f32.mrf.mxu0
          %v1517 = vadd.f32 %v1504, %v1516
          %v1518 = vpop.f32.mrf.mxu0
          %1519 = vdwg.mxu0
          %1520 = vmatpush.bf16.msra.mxu0 %v1350
          %1521 = vmatpush.bf16.msra.mxu0 %v1348
          %1522 = vmatpush.bf16.msra.mxu0 %v1346
          %1523 = vmatpush.bf16.msra.mxu0 %v1344
          %1524 = vmatpush.bf16.msra.mxu0 %v1342
          %1525 = vmatpush.bf16.msra.mxu0 %v1340
          %1526 = vmatpush.bf16.msra.mxu0 %v1338
          %1527 = vmatpush.bf16.msra.mxu0 %v1336
          %1528 = vmatmul.bf16.gmra.mxu0 %v1074
          %v1529 = vpop.f32.mrf.mxu0
          %v1530 = vadd.f32 %v1465, %v1529
          %v1531 = vpop.f32.mrf.mxu0
          %1532 = vdwg.mxu0
          %1533 = vmatpush.bf16.msra.mxu0 %v1366
          %1534 = vmatpush.bf16.msra.mxu0 %v1364
          %1535 = vmatpush.bf16.msra.mxu0 %v1362
          %1536 = vmatpush.bf16.msra.mxu0 %v1360
          %1537 = vmatpush.bf16.msra.mxu0 %v1358
          %1538 = vmatpush.bf16.msra.mxu0 %v1356
          %1539 = vmatpush.bf16.msra.mxu0 %v1354
          %1540 = vmatpush.bf16.msra.mxu0 %v1352
          %1541 = vmatmul.bf16.gmra.mxu0 %v1075
          %v1542 = vpop.f32.mrf.mxu0
          %v1543 = vadd.f32 %v1530, %v1542
          %v1544 = vpop.f32.mrf.mxu0
          %1545 = vdwg.mxu0
          %1546 = vmatpush.bf16.msra.mxu0 %v1382
          %1547 = vmatpush.bf16.msra.mxu0 %v1380
          %1548 = vmatpush.bf16.msra.mxu0 %v1378
          %1549 = vmatpush.bf16.msra.mxu0 %v1376
          %1550 = vmatpush.bf16.msra.mxu0 %v1374
          %1551 = vmatpush.bf16.msra.mxu0 %v1372
          %1552 = vmatpush.bf16.msra.mxu0 %v1370
          %1553 = vmatpush.bf16.msra.mxu0 %v1368
          %1554 = vmatmul.bf16.gmra.mxu0 %v1076
          %v1555 = vpop.f32.mrf.mxu0
          %v1556 = vadd.f32 %v1543, %v1555
          %v1557 = vpop.f32.mrf.mxu0
          %1558 = vdwg.mxu0
          %1559 = vmatpush.bf16.msra.mxu0 %v1398
          %1560 = vmatpush.bf16.msra.mxu0 %v1396
          %1561 = vmatpush.bf16.msra.mxu0 %v1394
          %1562 = vmatpush.bf16.msra.mxu0 %v1392
          %1563 = vmatpush.bf16.msra.mxu0 %v1390
          %1564 = vmatpush.bf16.msra.mxu0 %v1388
          %1565 = vmatpush.bf16.msra.mxu0 %v1386
          %1566 = vmatpush.bf16.msra.mxu0 %v1384
          %1567 = vmatmul.bf16.gmra.mxu0 %v1077
          %v1568 = vpop.f32.mrf.mxu0
          %v1569 = vadd.f32 %v1556, %v1568
          %v1570 = vpop.f32.mrf.mxu0
          %1571 = vdwg.mxu0
          %v1572 = vmax.f32 %v1517, 0.0
          %v1573 = vmax.f32 %v1569, 0.0
          %v1574 = vpack.c.bf16 %v1572, %v1572
          %v1575 = vpack.c.bf16 %v1573, %v1573
          %v1576 = vld [vmem:[%s7] sm:$0xf]
          %v1577 = vld [vmem:[%s7 + $0x4] sm:$0xf]
          %v1578 = vld [vmem:[%s7 + $0x8] sm:$0xf]
          %v1579 = vld [vmem:[%s7 + $0xc] sm:$0xf]
          %v1580 = vld [vmem:[%s7 + $0x10] sm:$0xf]
          %v1581 = vld [vmem:[%s7 + $0x14] sm:$0xf]
          %v1582 = vld [vmem:[%s7 + $0x18] sm:$0xf]
          %v1583 = vld [vmem:[%s7 + $0x1c] sm:$0xf]
          %v1584 = vld [vmem:[%s7 + $0x20] sm:$0xf]
          %v1585 = vld [vmem:[%s7 + $0x24] sm:$0xf]
          %v1586 = vld [vmem:[%s7 + $0x28] sm:$0xf]
          %v1587 = vld [vmem:[%s7 + $0x2c] sm:$0xf]
          %v1588 = vld [vmem:[%s7 + $0x30] sm:$0xf]
          %v1589 = vld [vmem:[%s7 + $0x34] sm:$0xf]
          %v1590 = vld [vmem:[%s7 + $0x38] sm:$0xf]
          %v1591 = vld [vmem:[%s7 + $0x3c] sm:$0xf]
          %v1592 = vld [vmem:[%s7 + $0x40] sm:$0xf]
          %v1593 = vld [vmem:[%s7 + $0x44] sm:$0xf]
          %v1594 = vld [vmem:[%s7 + $0x48] sm:$0xf]
          %v1595 = vld [vmem:[%s7 + $0x4c] sm:$0xf]
          %v1596 = vld [vmem:[%s7 + $0x50] sm:$0xf]
          %v1597 = vld [vmem:[%s7 + $0x54] sm:$0xf]
          %v1598 = vld [vmem:[%s7 + $0x58] sm:$0xf]
          %v1599 = vld [vmem:[%s7 + $0x5c] sm:$0xf]
          %v1600 = vld [vmem:[%s7 + $0x60] sm:$0xf]
          %v1601 = vld [vmem:[%s7 + $0x64] sm:$0xf]
          %v1602 = vld [vmem:[%s7 + $0x68] sm:$0xf]
          %v1603 = vld [vmem:[%s7 + $0x6c] sm:$0xf]
          %v1604 = vld [vmem:[%s7 + $0x70] sm:$0xf]
          %v1605 = vld [vmem:[%s7 + $0x74] sm:$0xf]
          %v1606 = vld [vmem:[%s7 + $0x78] sm:$0xf]
          %v1607 = vld [vmem:[%s7 + $0x7c] sm:$0xf]
          %v1608 = vld [vmem:[%s8] sm:$0x1]
          %v1641 = vunpack.c.l.b16 %v1576
          %v1642 = vunpack.c.l.b16 %v1577
          %v1643 = vunpack.c.l.b16 %v1578
          %v1644 = vunpack.c.l.b16 %v1579
          %v1645 = vunpack.c.l.b16 %v1580
          %v1646 = vunpack.c.l.b16 %v1581
          %v1647 = vunpack.c.l.b16 %v1582
          %v1648 = vunpack.c.l.b16 %v1583
          %v1649 = vunpack.c.l.b16 %v1584
          %v1650 = vunpack.c.l.b16 %v1585
          %v1651 = vunpack.c.l.b16 %v1586
          %v1652 = vunpack.c.l.b16 %v1587
          %v1653 = vunpack.c.l.b16 %v1588
          %v1654 = vunpack.c.l.b16 %v1589
          %v1655 = vunpack.c.l.b16 %v1590
          %v1656 = vunpack.c.l.b16 %v1591
          %v1657 = vunpack.c.l.b16 %v1592
          %v1658 = vunpack.c.l.b16 %v1593
          %v1659 = vunpack.c.l.b16 %v1594
          %v1660 = vunpack.c.l.b16 %v1595
          %v1661 = vunpack.c.l.b16 %v1596
          %v1662 = vunpack.c.l.b16 %v1597
          %v1663 = vunpack.c.l.b16 %v1598
          %v1664 = vunpack.c.l.b16 %v1599
          %v1665 = vunpack.c.l.b16 %v1600
          %v1666 = vunpack.c.l.b16 %v1601
          %v1667 = vunpack.c.l.b16 %v1602
          %v1668 = vunpack.c.l.b16 %v1603
          %v1669 = vunpack.c.l.b16 %v1604
          %v1670 = vunpack.c.l.b16 %v1605
          %v1671 = vunpack.c.l.b16 %v1606
          %v1672 = vunpack.c.l.b16 %v1607
          %v1673 = vpack.c.b16 %v1642, %v1641
          %v1674 = vpack.c.b16 %v1644, %v1643
          %v1675 = vpack.c.b16 %v1646, %v1645
          %v1676 = vpack.c.b16 %v1648, %v1647
          %v1677 = vpack.c.b16 %v1650, %v1649
          %v1678 = vpack.c.b16 %v1652, %v1651
          %v1679 = vpack.c.b16 %v1654, %v1653
          %v1680 = vpack.c.b16 %v1656, %v1655
          %v1681 = vpack.c.b16 %v1658, %v1657
          %v1682 = vpack.c.b16 %v1660, %v1659
          %v1683 = vpack.c.b16 %v1662, %v1661
          %v1684 = vpack.c.b16 %v1664, %v1663
          %v1685 = vpack.c.b16 %v1666, %v1665
          %v1686 = vpack.c.b16 %v1668, %v1667
          %v1687 = vpack.c.b16 %v1670, %v1669
          %v1688 = vpack.c.b16 %v1672, %v1671
          %1705 = vmatpush.bf16.msra.mxu0 %v1680
          %1706 = vmatpush.bf16.msra.mxu0 %v1679
          %1707 = vmatpush.bf16.msra.mxu0 %v1678
          %1708 = vmatpush.bf16.msra.mxu0 %v1677
          %1709 = vmatpush.bf16.msra.mxu0 %v1676
          %1710 = vmatpush.bf16.msra.mxu0 %v1675
          %1711 = vmatpush.bf16.msra.mxu0 %v1674
          %1712 = vmatpush.bf16.msra.mxu0 %v1673
          %1713 = vmatmul.bf16.gmra.mxu0 %v1574
          %v1714 = vpop.f32.mrf.mxu0
          %v1715 = vadd.f32 %v1608, %v1714
          %v1716 = vpop.f32.mrf.mxu0
          %1717 = vdwg.mxu0
          %1718 = vmatpush.bf16.msra.mxu0 %v1688
          %1719 = vmatpush.bf16.msra.mxu0 %v1687
          %1720 = vmatpush.bf16.msra.mxu0 %v1686
          %1721 = vmatpush.bf16.msra.mxu0 %v1685
          %1722 = vmatpush.bf16.msra.mxu0 %v1684
          %1723 = vmatpush.bf16.msra.mxu0 %v1683
          %1724 = vmatpush.bf16.msra.mxu0 %v1682
          %1725 = vmatpush.bf16.msra.mxu0 %v1681
          %1726 = vmatmul.bf16.gmra.mxu0 %v1575
          %v1727 = vpop.f32.mrf.mxu0
          %v1728 = vadd.f32 %v1715, %v1727
          %v1729 = vpop.f32.mrf.mxu0
          %1730 = vdwg.mxu0
          %1731 = vst [vmem:[%s375] sm:$0x1] %v1728
        $region64: #{_lambda_.1} parent=55 // pred_fallthru
          _
        %s1732 = sand.u32 %s241, 1
        %s1733 = scalar_lea.sflag [#allocation4], %s1732
        %s1734 = sand.u32 %s241, 1
        %s1735 = scalar_lea.vmem [#allocation3], %s1734
        %p1736 = scmp.lt.s32.totalorder %s29, 1
        %s1737 = scalar_select %p1736, %s29, 1
        %s1738 = smul.addr %s1737, 2
        %s1739 = scalar_lea.vmem %s10, %s1738
        // Predicated region
        $region65: #{_lambda_.1} parent=55 // pred_check
          %p1740 = pneg %p251
        $region66: #{_lambda_.1} parent=55 // pred_check_branch
          %1742 = sbr.rel (%p1740) target = $region68
        $region67: #{_lambda_.1} parent=55 // pred_region
          %1744 = vsyncadd %s1733, 0
          %s1745 = scalar_lea.hbm %s9, %s29
          %s1747 = sshll.u32 %s1735, 4
          %s1748 = int_to_ptr.vmem [resolvable:$true] %s1747
          %s1749 = sshll.u32 %s1745, 4
          %s1750 = int_to_ptr.hbm [resolvable:$true] %s1749
          %1752 = dma.vmem_to_hbm [thread:$0]  %s1748, 16, %s1750, %s1733
        $region68: #{_lambda_.1} parent=55 // pred_fallthru
          _
        // Predicated region
        $region69: #{_lambda_.1} parent=55 // pred_check
          %p1753 = pneg %p277
        $region70: #{_lambda_.1} parent=55 // pred_check_branch
          %1755 = sbr.rel (%p1753) target = $region72
        $region71: #{_lambda_.1} parent=55 // pred_region
          _
        $region72: #{_lambda_.1} parent=55 // pred_fallthru
          _
      $region56: #{_lambda_.1} parent=5 // pred_fallthru
        _
      %p1756 = scmp.le.s32.totalorder 2, %s20
      // Predicated region
      $region73: #{_lambda_.1} parent=5 // pred_check
        %p1757 = pneg %p1756
      $region74: #{_lambda_.1} parent=5 // pred_check_branch
        %1759 = sbr.rel (%p1757) target = $region76
      $region75: #{_lambda_.1} parent=5 // pred_region
        %s1760 = ssub.s32 %s20, 2
        // Predicated region
        $region77: #{_lambda_.1} parent=75 // pred_check
          %p1761 = pneg %p257
        $region78: #{_lambda_.1} parent=75 // pred_check_branch
          %1763 = sbr.rel (%p1761) target = $region80
        $region79: #{_lambda_.1} parent=75 // pred_region
          %s1764 = sand.u32 %s242, 1
          %s1765 = scalar_lea.sflag [#allocation4], %s1764
          %s1766 = sand.u32 %s242, 1
          %s1767 = scalar_lea.vmem [#allocation3], %s1766
          %1769 = dma.done %s1765, 16
        $region80: #{_lambda_.1} parent=75 // pred_fallthru
          _
        // Predicated region
        $region81: #{_lambda_.1} parent=75 // pred_check
          %p1770 = pneg %p283
        $region82: #{_lambda_.1} parent=75 // pred_check_branch
          %1772 = sbr.rel (%p1770) target = $region84
        $region83: #{_lambda_.1} parent=75 // pred_region
          %p1773 = scmp.lt.s32.totalorder %s31, 1
          %s1774 = scalar_select %p1773, %s31, 1
          %s1775 = smul.addr %s1774, 2
          %s1776 = scalar_lea.vmem %s10, %s1775
        $region84: #{_lambda_.1} parent=75 // pred_fallthru
          _
      $region76: #{_lambda_.1} parent=5 // pred_fallthru
        _
    $region6: #{_lambda_.1} parent=1 // loop_footer
      %s24 = sadd.s32 1, %s20
    $region7: #{_lambda_.1} parent=1 // loop_footer_branch
      %19 = sbr.rel target = $region3
    $region8: #{_lambda_.1} parent=1 // loop_exit
      _
    %1777 = vsyncpa [#allocation4], 1
    %s1778 = scalar_lea.sflag [#allocation4], 1
    %1779 = vsyncpa %s1778, 1

</llo_original>
